<compile_context>
chip_gen: v5e
topology: v5e:2x2
jax: 0.10.0
libtpu: 0.0.40
codegen_flags: <defaults>
</compile_context>

<pallas_src>
import jax
import jax.numpy as jnp
from jax.experimental import pallas as pl
from jax.experimental.pallas import tpu as pltpu

LN_EPS = 1e-6

PARAM_ORDER = (
    "wqkv", "bqkv", "wo", "bo",
    "ln1_g", "ln1_b", "ln2_g", "ln2_b",
    "w1", "b1", "w2", "b2",
    "fg", "fb",
)
CONST_PARAMS = ("fg", "fb")   # not indexed by layer


def make_encoder_kernel(num_layers: int, h: int, d_model: int, d_ff: int,
                        bb: int, seq: int):
    D = d_model
    dk = D // h
    M = bb * seq
    scale = 1.0 / (dk ** 0.5)

    def layer_norm(t, g, b):
        mu = jnp.mean(t, axis=-1, keepdims=True)
        var = jnp.mean((t - mu) ** 2, axis=-1, keepdims=True)
        return (t - mu) * jax.lax.rsqrt(var + LN_EPS) * g + b

    def kernel(x_ref,
               wqkv_ref, bqkv_ref, wo_ref, bo_ref,
               ln1_g_ref, ln1_b_ref, ln2_g_ref, ln2_b_ref,
               w1_ref, b1_ref, w2_ref, b2_ref,
               fg_ref, fb_ref,
               out_ref, x_sc):
        l = pl.program_id(1)

        # ---- carry init: load this batch block once, fold batch into M ----
        @pl.when(l == 0)
        def _():
            x_sc[...] = x_ref[...].reshape(M, D).astype(jnp.float32)

        x = x_sc[...]                                           # (M, D)

        # ---- self-attention sublayer (pre-norm residual) ----
        xn = layer_norm(x, ln1_g_ref[0], ln1_b_ref[0])
        # fused QKV: one MXU push instead of three on the same LHS tile
        qkv = jnp.dot(xn, wqkv_ref[0],
                      preferred_element_type=jnp.float32) + bqkv_ref[0]
        q = qkv[:, 0 * D:1 * D] * scale        # fold 1/sqrt(dk) into q (M x D)
        k = qkv[:, 1 * D:2 * D]
        v = qkv[:, 2 * D:3 * D]

        # heads: static unroll over h, batched over the batch-block dim,
        # last-dim contraction (no explicit k transpose).
        # TODO(synk): fully head-batched 4-D dot_general once Mosaic lowering
        #             for two batch dims is guaranteed; kept 3-D einsums here.
        head_outs = []
        for hd in range(h):
            sl = slice(hd * dk, (hd + 1) * dk)
            qh = q[:, sl].reshape(bb, seq, dk)
            kh = k[:, sl].reshape(bb, seq, dk)
            vh = v[:, sl].reshape(bb, seq, dk)
            s = jnp.einsum("bqd,bkd->bqk", qh, kh,
                           preferred_element_type=jnp.float32)
            s = s - jnp.max(s, axis=-1, keepdims=True)          # stable softmax
            p = jnp.exp(s)
            p = p / jnp.sum(p, axis=-1, keepdims=True)
            o = jnp.einsum("bqk,bkd->bqd", p, vh,
                           preferred_element_type=jnp.float32)
            head_outs.append(o.reshape(M, dk))
        attn = jnp.concatenate(head_outs, axis=-1)              # (M, D)
        attn = jnp.dot(attn, wo_ref[0],
                       preferred_element_type=jnp.float32) + bo_ref[0]
        x = x + attn                                            # dropout == id

        # ---- feed-forward sublayer (pre-norm residual) ----
        xn2 = layer_norm(x, ln2_g_ref[0], ln2_b_ref[0])
        h1 = jnp.dot(xn2, w1_ref[0],
                     preferred_element_type=jnp.float32) + b1_ref[0]
        h1 = jnp.maximum(h1, 0.0)                               # ReLU
        x = x + jnp.dot(h1, w2_ref[0],
                        preferred_element_type=jnp.float32) + b2_ref[0]

        x_sc[...] = x                                           # carry to next layer

        # ---- finalize: final LayerNorm + store on last layer ----
        @pl.when(l == pl.num_programs(1) - 1)
        def _():
            out = layer_norm(x_sc[...], fg_ref[...], fb_ref[...])
            out_ref[...] = out.reshape(bb, seq, D).astype(out_ref.dtype)

    return kernel


def _pick_block_b(B: int, S: int, target_m: int = 256) -> int:
    """Largest divisor of B such that block_b * S <= target_m rows."""
    bb = 1
    for cand in range(1, B + 1):
        if B % cand == 0 and cand * S <= target_m:
            bb = cand
    return bb


def encoder_forward(x, params, *, num_layers, h, d_model, d_ff, block_b=None):
    B, S, D = x.shape
    assert D == d_model and D % h == 0
    if block_b is None:
        block_b = _pick_block_b(B, S)
    assert B % block_b == 0

    kernel = make_encoder_kernel(num_layers, h, d_model, d_ff, block_b, S)

    def act_spec():
        return pl.BlockSpec((block_b, S, D), lambda b, l: (b, 0, 0))

    def per_layer_spec(p):
        nd = p.ndim - 1
        return pl.BlockSpec((1,) + p.shape[1:],
                            lambda b, l, _nd=nd: (l,) + (0,) * _nd)

    def const_spec(p):
        nd = p.ndim
        return pl.BlockSpec(p.shape, lambda b, l, _nd=nd: (0,) * _nd)

    param_list = [params[name] for name in PARAM_ORDER]
    in_specs = [act_spec()] + [
        const_spec(p) if name in CONST_PARAMS else per_layer_spec(p)
        for name, p in zip(PARAM_ORDER, param_list)
    ]

    grid = (B // block_b, num_layers)
    return pl.pallas_call(
        kernel,
        out_shape=jax.ShapeDtypeStruct((B, S, D), x.dtype),
        grid_spec=pltpu.PrefetchScalarGridSpec(
            num_scalar_prefetch=0,
            grid=grid,
            in_specs=in_specs,
            out_specs=act_spec(),
            scratch_shapes=[pltpu.VMEM((block_b * S, D), jnp.float32)],
        ),
        compiler_params=pltpu.CompilerParams(
            dimension_semantics=("parallel", "arbitrary")),
    )(x, *param_list)


def init_params(key, *, num_layers, d_model, d_ff):
    L, D, F = num_layers, d_model, d_ff
    ks = iter(jax.random.split(key, 12))

    def nrm(k, shape, s=0.05):
        return (s * jax.random.normal(k, shape)).astype(jnp.float32)

    return {
        "wqkv": nrm(next(ks), (L, D, 3 * D)),
        "bqkv": nrm(next(ks), (L, 1, 3 * D), 0.01),
        "wo": nrm(next(ks), (L, D, D)), "bo": nrm(next(ks), (L, 1, D), 0.01),
        "ln1_g": jnp.ones((L, 1, D), jnp.float32),
        "ln1_b": jnp.zeros((L, 1, D), jnp.float32),
        "ln2_g": jnp.ones((L, 1, D), jnp.float32),
        "ln2_b": jnp.zeros((L, 1, D), jnp.float32),
        "w1": nrm(next(ks), (L, D, F)), "b1": nrm(next(ks), (L, 1, F), 0.01),
        "w2": nrm(next(ks), (L, F, D)), "b2": nrm(next(ks), (L, 1, D), 0.01),
        "fg": jnp.ones((1, D), jnp.float32),
        "fb": jnp.zeros((1, D), jnp.float32),
    }


def reference_forward(x, params, *, num_layers, h, d_model, d_ff):
    """Pure-JAX reference with identical math, for a correctness check."""
    D = d_model
    dk = D // h
    scale = 1.0 / (dk ** 0.5)

    def ln(t, g, b):
        mu = jnp.mean(t, axis=-1, keepdims=True)
        var = jnp.mean((t - mu) ** 2, axis=-1, keepdims=True)
        return (t - mu) * jax.lax.rsqrt(var + LN_EPS) * g + b

    out = x
    for l in range(num_layers):
        xn = ln(out, params["ln1_g"][l], params["ln1_b"][l])
        qkv = xn @ params["wqkv"][l] + params["bqkv"][l]
        q, k, v = qkv[..., :D], qkv[..., D:2 * D], qkv[..., 2 * D:]
        B, S, _ = q.shape
        qh = q.reshape(B, S, h, dk).transpose(0, 2, 1, 3)
        kh = k.reshape(B, S, h, dk).transpose(0, 2, 1, 3)
        vh = v.reshape(B, S, h, dk).transpose(0, 2, 1, 3)
        s = jnp.einsum("bhqd,bhkd->bhqk", qh, kh) * scale
        p = jax.nn.softmax(s, axis=-1)
        a = jnp.einsum("bhqk,bhkd->bhqd", p, vh).transpose(0, 2, 1, 3).reshape(B, S, D)
        out = out + (a @ params["wo"][l] + params["bo"][l])
        xn2 = ln(out, params["ln2_g"][l], params["ln2_b"][l])
        ff = jnp.maximum(xn2 @ params["w1"][l] + params["b1"][l], 0.0) \
             @ params["w2"][l] + params["b2"][l]
        out = out + ff
    return ln(out, params["fg"], params["fb"])


if __name__ == "__main__":
    d_model, h, d_ff, num_layers = 32, 4, 64, 2
    B, S = 2, 8

    key = jax.random.PRNGKey(0)
    kx, kp = jax.random.split(key)
    x = jax.random.normal(kx, (B, S, d_model), dtype=jnp.float32)
    params = init_params(kp, num_layers=num_layers, d_model=d_model, d_ff=d_ff)

    y = encoder_forward(x, params, num_layers=num_layers, h=h,
                        d_model=d_model, d_ff=d_ff)
    y = jax.block_until_ready(y)

    y_ref = reference_forward(x, params, num_layers=num_layers, h=h,
                              d_model=d_model, d_ff=d_ff)
    assert y.shape == (B, S, d_model)
    assert jnp.allclose(y, y_ref, rtol=1e-4, atol=1e-4), "mismatch vs reference"

    print("KERNEL_OK")
</pallas_src>

<mosaic_0001>
module attributes {stable_mosaic.version = 11 : i64} {
  func.func @kernel(%arg0: i32, %arg1: i32, %arg2: memref<2x8x32xf32, #tpu.memory_space<vmem>>, %arg3: memref<1x32x96xf32, #tpu.memory_space<vmem>>, %arg4: memref<1x1x96xf32, #tpu.memory_space<vmem>>, %arg5: memref<1x32x32xf32, #tpu.memory_space<vmem>>, %arg6: memref<1x1x32xf32, #tpu.memory_space<vmem>>, %arg7: memref<1x1x32xf32, #tpu.memory_space<vmem>>, %arg8: memref<1x1x32xf32, #tpu.memory_space<vmem>>, %arg9: memref<1x1x32xf32, #tpu.memory_space<vmem>>, %arg10: memref<1x1x32xf32, #tpu.memory_space<vmem>>, %arg11: memref<1x32x64xf32, #tpu.memory_space<vmem>>, %arg12: memref<1x1x64xf32, #tpu.memory_space<vmem>>, %arg13: memref<1x64x32xf32, #tpu.memory_space<vmem>>, %arg14: memref<1x1x32xf32, #tpu.memory_space<vmem>>, %arg15: memref<1x32xf32, #tpu.memory_space<vmem>>, %arg16: memref<1x32xf32, #tpu.memory_space<vmem>>, %arg17: memref<2x8x32xf32, #tpu.memory_space<vmem>>, %arg18: memref<16x32xf32, #tpu.memory_space<vmem>>) attributes {dimension_semantics = [#tpu.dimension_semantics<parallel>, #tpu.dimension_semantics<arbitrary>], iteration_bounds = array<i64: 1, 2>, scalar_prefetch = 0 : i64, scratch_operands = 1 : i64, tpu.core_type = #tpu.core_type<tc>, window_params = [{transform_indices = @transform_0, window_bounds = array<i64: 2, 8, 32>}, {transform_indices = @transform_1, window_bounds = array<i64: 1, 32, 96>}, {transform_indices = @transform_2, window_bounds = array<i64: 1, 1, 96>}, {transform_indices = @transform_3, window_bounds = array<i64: 1, 32, 32>}, {transform_indices = @transform_4, window_bounds = array<i64: 1, 1, 32>}, {transform_indices = @transform_5, window_bounds = array<i64: 1, 1, 32>}, {transform_indices = @transform_6, window_bounds = array<i64: 1, 1, 32>}, {transform_indices = @transform_7, window_bounds = array<i64: 1, 1, 32>}, {transform_indices = @transform_8, window_bounds = array<i64: 1, 1, 32>}, {transform_indices = @transform_9, window_bounds = array<i64: 1, 32, 64>}, {transform_indices = @transform_10, window_bounds = array<i64: 1, 1, 64>}, {transform_indices = @transform_11, window_bounds = array<i64: 1, 64, 32>}, {transform_indices = @transform_12, window_bounds = array<i64: 1, 1, 32>}, {pipeline_mode = #tpu.pipeline_mode<synchronous>, transform_indices = @transform_13, window_bounds = array<i64: 1, 32>}, {pipeline_mode = #tpu.pipeline_mode<synchronous>, transform_indices = @transform_14, window_bounds = array<i64: 1, 32>}, {transform_indices = @transform_15, window_bounds = array<i64: 2, 8, 32>}]} {
    %c0_i32 = arith.constant 0 : i32
    %0 = arith.cmpi eq, %arg1, %c0_i32 : i32
    %1 = arith.extui %0 : i1 to i32
    %c0_i32_0 = arith.constant 0 : i32
    %2 = arith.cmpi ne, %1, %c0_i32_0 : i32
    scf.if %2 {
      %c0_72 = arith.constant 0 : index
      %c0_73 = arith.constant 0 : index
      %c0_74 = arith.constant 0 : index
      %170 = vector.load %arg2[%c0_72, %c0_73, %c0_74] : memref<2x8x32xf32, #tpu.memory_space<vmem>>, vector<2x8x32xf32>
      %171 = vector.shape_cast %170 : vector<2x8x32xf32> to vector<16x32xf32>
      %c0_75 = arith.constant 0 : index
      %c0_76 = arith.constant 0 : index
      %172 = vector.load %arg18[%c0_75, %c0_76] : memref<16x32xf32, #tpu.memory_space<vmem>>, vector<16x32xf32>
      tpu.vector_store %arg18[%c0_75, %c0_76], %171 {strides = array<i32>} : memref<16x32xf32, #tpu.memory_space<vmem>>, vector<16x32xf32>,
    } else {
    }
    %c0 = arith.constant 0 : index
    %c0_1 = arith.constant 0 : index
    %3 = vector.load %arg18[%c0, %c0_1] : memref<16x32xf32, #tpu.memory_space<vmem>>, vector<16x32xf32>
    %c0_2 = arith.constant 0 : index
    %c0_3 = arith.constant 0 : index
    %c0_4 = arith.constant 0 : index
    %4 = vector.load %arg7[%c0_2, %c0_3, %c0_4] : memref<1x1x32xf32, #tpu.memory_space<vmem>>, vector<1x1x32xf32>
    %5 = vector.shape_cast %4 : vector<1x1x32xf32> to vector<1x32xf32>
    %c0_5 = arith.constant 0 : index
    %c0_6 = arith.constant 0 : index
    %c0_7 = arith.constant 0 : index
    %6 = vector.load %arg8[%c0_5, %c0_6, %c0_7] : memref<1x1x32xf32, #tpu.memory_space<vmem>>, vector<1x1x32xf32>
    %7 = vector.shape_cast %6 : vector<1x1x32xf32> to vector<1x32xf32>
    %cst = arith.constant dense<0.000000e+00> : vector<16xf32>
    %8 = vector.multi_reduction <add>, %3, %cst [1] : vector<16x32xf32> to vector<16xf32>
    %9 = vector.shape_cast %8 : vector<16xf32> to vector<16x1xf32>
    %cst_8 = arith.constant 3.200000e+01 : f32
    %10 = vector.broadcast %cst_8 : f32 to vector<16x1xf32>
    %11 = arith.divf %9, %10 : vector<16x1xf32>
    %12 = vector.broadcast %11 : vector<16x1xf32> to vector<16x32xf32>
    %13 = arith.subf %3, %12 : vector<16x32xf32>
    %14 = arith.mulf %13, %13 : vector<16x32xf32>
    %cst_9 = arith.constant dense<0.000000e+00> : vector<16xf32>
    %15 = vector.multi_reduction <add>, %14, %cst_9 [1] : vector<16x32xf32> to vector<16xf32>
    %16 = vector.shape_cast %15 : vector<16xf32> to vector<16x1xf32>
    %cst_10 = arith.constant 3.200000e+01 : f32
    %17 = vector.broadcast %cst_10 : f32 to vector<16x1xf32>
    %18 = arith.divf %16, %17 : vector<16x1xf32>
    %19 = vector.broadcast %11 : vector<16x1xf32> to vector<16x32xf32>
    %20 = arith.subf %3, %19 : vector<16x32xf32>
    %cst_11 = arith.constant 9.99999997E-7 : f32
    %21 = vector.broadcast %cst_11 : f32 to vector<16x1xf32>
    %22 = arith.addf %18, %21 : vector<16x1xf32>
    %23 = math.rsqrt %22 : vector<16x1xf32>
    %24 = vector.broadcast %23 : vector<16x1xf32> to vector<16x32xf32>
    %25 = arith.mulf %20, %24 : vector<16x32xf32>
    %26 = vector.broadcast %5 : vector<1x32xf32> to vector<16x32xf32>
    %27 = arith.mulf %25, %26 : vector<16x32xf32>
    %28 = vector.broadcast %7 : vector<1x32xf32> to vector<16x32xf32>
    %29 = arith.addf %27, %28 : vector<16x32xf32>
    %c0_12 = arith.constant 0 : index
    %c0_13 = arith.constant 0 : index
    %c0_14 = arith.constant 0 : index
    %30 = vector.load %arg3[%c0_12, %c0_13, %c0_14] : memref<1x32x96xf32, #tpu.memory_space<vmem>>, vector<1x32x96xf32>
    %31 = vector.shape_cast %30 : vector<1x32x96xf32> to vector<32x96xf32>
    %cst_15 = arith.constant dense<0.000000e+00> : vector<16x96xf32>
    %32 = tpu.matmul %29, %31, %cst_15 {dimension_numbers = #tpu.dot_dimension_numbers<[1], [0], [0], [1], [0, 0, 1, 1], [], []>} : vector<16x32xf32>, vector<32x96xf32>, vector<16x96xf32> -> vector<16x96xf32>
    %c0_16 = arith.constant 0 : index
    %c0_17 = arith.constant 0 : index
    %c0_18 = arith.constant 0 : index
    %33 = vector.load %arg4[%c0_16, %c0_17, %c0_18] : memref<1x1x96xf32, #tpu.memory_space<vmem>>, vector<1x1x96xf32>
    %34 = vector.shape_cast %33 : vector<1x1x96xf32> to vector<1x96xf32>
    %35 = vector.broadcast %34 : vector<1x96xf32> to vector<16x96xf32>
    %36 = arith.addf %32, %35 : vector<16x96xf32>
    %37 = vector.extract_strided_slice %36 {offsets = [0, 0], sizes = [16, 32], strides = [1, 1]} : vector<16x96xf32> to vector<16x32xf32>
    %cst_19 = arith.constant 0.353553385 : f32
    %38 = vector.broadcast %cst_19 : f32 to vector<16x32xf32>
    %39 = arith.mulf %37, %38 : vector<16x32xf32>
    %40 = vector.extract_strided_slice %36 {offsets = [0, 32], sizes = [16, 32], strides = [1, 1]} : vector<16x96xf32> to vector<16x32xf32>
    %41 = vector.extract_strided_slice %36 {offsets = [0, 64], sizes = [16, 32], strides = [1, 1]} : vector<16x96xf32> to vector<16x32xf32>
    %42 = vector.extract_strided_slice %39 {offsets = [0, 0], sizes = [16, 8], strides = [1, 1]} : vector<16x32xf32> to vector<16x8xf32>
    %43 = vector.shape_cast %42 : vector<16x8xf32> to vector<2x8x8xf32>
    %44 = vector.extract_strided_slice %40 {offsets = [0, 0], sizes = [16, 8], strides = [1, 1]} : vector<16x32xf32> to vector<16x8xf32>
    %45 = vector.shape_cast %44 : vector<16x8xf32> to vector<2x8x8xf32>
    %46 = vector.extract_strided_slice %41 {offsets = [0, 0], sizes = [16, 8], strides = [1, 1]} : vector<16x32xf32> to vector<16x8xf32>
    %47 = vector.shape_cast %46 : vector<16x8xf32> to vector<2x8x8xf32>
    "tpu.trace_start"() <{level = 10 : i32, message = "bqd,bkd->bqk"}> : () -> ()
    %cst_20 = arith.constant dense<0.000000e+00> : vector<2x8x8xf32>
    %48 = tpu.matmul %43, %45, %cst_20 {dimension_numbers = #tpu.dot_dimension_numbers<[2], [2], [1], [1], [0, 0, 0, 1, 1, 1], [0], [0]>} : vector<2x8x8xf32>, vector<2x8x8xf32>, vector<2x8x8xf32> -> vector<2x8x8xf32>
    "tpu.trace_stop"() : () -> ()
    %cst_21 = arith.constant dense<0xFF800000> : vector<2x8xf32>
    %49 = vector.multi_reduction <maximumf>, %48, %cst_21 [2] : vector<2x8x8xf32> to vector<2x8xf32>
    %50 = vector.shape_cast %49 : vector<2x8xf32> to vector<2x8x1xf32>
    %51 = vector.broadcast %50 : vector<2x8x1xf32> to vector<2x8x8xf32>
    %52 = arith.subf %48, %51 : vector<2x8x8xf32>
    %53 = math.exp %52 : vector<2x8x8xf32>
    %cst_22 = arith.constant dense<0.000000e+00> : vector<2x8xf32>
    %54 = vector.multi_reduction <add>, %53, %cst_22 [2] : vector<2x8x8xf32> to vector<2x8xf32>
    %55 = vector.shape_cast %54 : vector<2x8xf32> to vector<2x8x1xf32>
    %56 = vector.broadcast %55 : vector<2x8x1xf32> to vector<2x8x8xf32>
    %57 = arith.divf %53, %56 : vector<2x8x8xf32>
    "tpu.trace_start"() <{level = 10 : i32, message = "bqk,bkd->bqd"}> : () -> ()
    %cst_23 = arith.constant dense<0.000000e+00> : vector<2x8x8xf32>
    %58 = tpu.matmul %57, %47, %cst_23 {dimension_numbers = #tpu.dot_dimension_numbers<[2], [1], [1], [2], [0, 0, 0, 1, 1, 2], [0], [0]>} : vector<2x8x8xf32>, vector<2x8x8xf32>, vector<2x8x8xf32> -> vector<2x8x8xf32>
    "tpu.trace_stop"() : () -> ()
    %59 = vector.shape_cast %58 : vector<2x8x8xf32> to vector<16x8xf32>
    %60 = vector.extract_strided_slice %39 {offsets = [0, 8], sizes = [16, 8], strides = [1, 1]} : vector<16x32xf32> to vector<16x8xf32>
    %61 = vector.shape_cast %60 : vector<16x8xf32> to vector<2x8x8xf32>
    %62 = vector.extract_strided_slice %40 {offsets = [0, 8], sizes = [16, 8], strides = [1, 1]} : vector<16x32xf32> to vector<16x8xf32>
    %63 = vector.shape_cast %62 : vector<16x8xf32> to vector<2x8x8xf32>
    %64 = vector.extract_strided_slice %41 {offsets = [0, 8], sizes = [16, 8], strides = [1, 1]} : vector<16x32xf32> to vector<16x8xf32>
    %65 = vector.shape_cast %64 : vector<16x8xf32> to vector<2x8x8xf32>
    "tpu.trace_start"() <{level = 10 : i32, message = "bqd,bkd->bqk"}> : () -> ()
    %cst_24 = arith.constant dense<0.000000e+00> : vector<2x8x8xf32>
    %66 = tpu.matmul %61, %63, %cst_24 {dimension_numbers = #tpu.dot_dimension_numbers<[2], [2], [1], [1], [0, 0, 0, 1, 1, 1], [0], [0]>} : vector<2x8x8xf32>, vector<2x8x8xf32>, vector<2x8x8xf32> -> vector<2x8x8xf32>
    "tpu.trace_stop"() : () -> ()
    %cst_25 = arith.constant dense<0xFF800000> : vector<2x8xf32>
    %67 = vector.multi_reduction <maximumf>, %66, %cst_25 [2] : vector<2x8x8xf32> to vector<2x8xf32>
    %68 = vector.shape_cast %67 : vector<2x8xf32> to vector<2x8x1xf32>
    %69 = vector.broadcast %68 : vector<2x8x1xf32> to vector<2x8x8xf32>
    %70 = arith.subf %66, %69 : vector<2x8x8xf32>
    %71 = math.exp %70 : vector<2x8x8xf32>
    %cst_26 = arith.constant dense<0.000000e+00> : vector<2x8xf32>
    %72 = vector.multi_reduction <add>, %71, %cst_26 [2] : vector<2x8x8xf32> to vector<2x8xf32>
    %73 = vector.shape_cast %72 : vector<2x8xf32> to vector<2x8x1xf32>
    %74 = vector.broadcast %73 : vector<2x8x1xf32> to vector<2x8x8xf32>
    %75 = arith.divf %71, %74 : vector<2x8x8xf32>
    "tpu.trace_start"() <{level = 10 : i32, message = "bqk,bkd->bqd"}> : () -> ()
    %cst_27 = arith.constant dense<0.000000e+00> : vector<2x8x8xf32>
    %76 = tpu.matmul %75, %65, %cst_27 {dimension_numbers = #tpu.dot_dimension_numbers<[2], [1], [1], [2], [0, 0, 0, 1, 1, 2], [0], [0]>} : vector<2x8x8xf32>, vector<2x8x8xf32>, vector<2x8x8xf32> -> vector<2x8x8xf32>
    "tpu.trace_stop"() : () -> ()
    %77 = vector.shape_cast %76 : vector<2x8x8xf32> to vector<16x8xf32>
    %78 = vector.extract_strided_slice %39 {offsets = [0, 16], sizes = [16, 8], strides = [1, 1]} : vector<16x32xf32> to vector<16x8xf32>
    %79 = vector.shape_cast %78 : vector<16x8xf32> to vector<2x8x8xf32>
    %80 = vector.extract_strided_slice %40 {offsets = [0, 16], sizes = [16, 8], strides = [1, 1]} : vector<16x32xf32> to vector<16x8xf32>
    %81 = vector.shape_cast %80 : vector<16x8xf32> to vector<2x8x8xf32>
    %82 = vector.extract_strided_slice %41 {offsets = [0, 16], sizes = [16, 8], strides = [1, 1]} : vector<16x32xf32> to vector<16x8xf32>
    %83 = vector.shape_cast %82 : vector<16x8xf32> to vector<2x8x8xf32>
    "tpu.trace_start"() <{level = 10 : i32, message = "bqd,bkd->bqk"}> : () -> ()
    %cst_28 = arith.constant dense<0.000000e+00> : vector<2x8x8xf32>
    %84 = tpu.matmul %79, %81, %cst_28 {dimension_numbers = #tpu.dot_dimension_numbers<[2], [2], [1], [1], [0, 0, 0, 1, 1, 1], [0], [0]>} : vector<2x8x8xf32>, vector<2x8x8xf32>, vector<2x8x8xf32> -> vector<2x8x8xf32>
    "tpu.trace_stop"() : () -> ()
    %cst_29 = arith.constant dense<0xFF800000> : vector<2x8xf32>
    %85 = vector.multi_reduction <maximumf>, %84, %cst_29 [2] : vector<2x8x8xf32> to vector<2x8xf32>
    %86 = vector.shape_cast %85 : vector<2x8xf32> to vector<2x8x1xf32>
    %87 = vector.broadcast %86 : vector<2x8x1xf32> to vector<2x8x8xf32>
    %88 = arith.subf %84, %87 : vector<2x8x8xf32>
    %89 = math.exp %88 : vector<2x8x8xf32>
    %cst_30 = arith.constant dense<0.000000e+00> : vector<2x8xf32>
    %90 = vector.multi_reduction <add>, %89, %cst_30 [2] : vector<2x8x8xf32> to vector<2x8xf32>
    %91 = vector.shape_cast %90 : vector<2x8xf32> to vector<2x8x1xf32>
    %92 = vector.broadcast %91 : vector<2x8x1xf32> to vector<2x8x8xf32>
    %93 = arith.divf %89, %92 : vector<2x8x8xf32>
    "tpu.trace_start"() <{level = 10 : i32, message = "bqk,bkd->bqd"}> : () -> ()
    %cst_31 = arith.constant dense<0.000000e+00> : vector<2x8x8xf32>
    %94 = tpu.matmul %93, %83, %cst_31 {dimension_numbers = #tpu.dot_dimension_numbers<[2], [1], [1], [2], [0, 0, 0, 1, 1, 2], [0], [0]>} : vector<2x8x8xf32>, vector<2x8x8xf32>, vector<2x8x8xf32> -> vector<2x8x8xf32>
    "tpu.trace_stop"() : () -> ()
    %95 = vector.shape_cast %94 : vector<2x8x8xf32> to vector<16x8xf32>
    %96 = vector.extract_strided_slice %39 {offsets = [0, 24], sizes = [16, 8], strides = [1, 1]} : vector<16x32xf32> to vector<16x8xf32>
    %97 = vector.shape_cast %96 : vector<16x8xf32> to vector<2x8x8xf32>
    %98 = vector.extract_strided_slice %40 {offsets = [0, 24], sizes = [16, 8], strides = [1, 1]} : vector<16x32xf32> to vector<16x8xf32>
    %99 = vector.shape_cast %98 : vector<16x8xf32> to vector<2x8x8xf32>
    %100 = vector.extract_strided_slice %41 {offsets = [0, 24], sizes = [16, 8], strides = [1, 1]} : vector<16x32xf32> to vector<16x8xf32>
    %101 = vector.shape_cast %100 : vector<16x8xf32> to vector<2x8x8xf32>
    "tpu.trace_start"() <{level = 10 : i32, message = "bqd,bkd->bqk"}> : () -> ()
    %cst_32 = arith.constant dense<0.000000e+00> : vector<2x8x8xf32>
    %102 = tpu.matmul %97, %99, %cst_32 {dimension_numbers = #tpu.dot_dimension_numbers<[2], [2], [1], [1], [0, 0, 0, 1, 1, 1], [0], [0]>} : vector<2x8x8xf32>, vector<2x8x8xf32>, vector<2x8x8xf32> -> vector<2x8x8xf32>
    "tpu.trace_stop"() : () -> ()
    %cst_33 = arith.constant dense<0xFF800000> : vector<2x8xf32>
    %103 = vector.multi_reduction <maximumf>, %102, %cst_33 [2] : vector<2x8x8xf32> to vector<2x8xf32>
    %104 = vector.shape_cast %103 : vector<2x8xf32> to vector<2x8x1xf32>
    %105 = vector.broadcast %104 : vector<2x8x1xf32> to vector<2x8x8xf32>
    %106 = arith.subf %102, %105 : vector<2x8x8xf32>
    %107 = math.exp %106 : vector<2x8x8xf32>
    %cst_34 = arith.constant dense<0.000000e+00> : vector<2x8xf32>
    %108 = vector.multi_reduction <add>, %107, %cst_34 [2] : vector<2x8x8xf32> to vector<2x8xf32>
    %109 = vector.shape_cast %108 : vector<2x8xf32> to vector<2x8x1xf32>
    %110 = vector.broadcast %109 : vector<2x8x1xf32> to vector<2x8x8xf32>
    %111 = arith.divf %107, %110 : vector<2x8x8xf32>
    "tpu.trace_start"() <{level = 10 : i32, message = "bqk,bkd->bqd"}> : () -> ()
    %cst_35 = arith.constant dense<0.000000e+00> : vector<2x8x8xf32>
    %112 = tpu.matmul %111, %101, %cst_35 {dimension_numbers = #tpu.dot_dimension_numbers<[2], [1], [1], [2], [0, 0, 0, 1, 1, 2], [0], [0]>} : vector<2x8x8xf32>, vector<2x8x8xf32>, vector<2x8x8xf32> -> vector<2x8x8xf32>
    "tpu.trace_stop"() : () -> ()
    %113 = vector.shape_cast %112 : vector<2x8x8xf32> to vector<16x8xf32>
    %114 = tpu.concatenate %59, %77, %95, %113 in 1 : vector<16x8xf32>, vector<16x8xf32>, vector<16x8xf32>, vector<16x8xf32> -> vector<16x32xf32>
    %c0_36 = arith.constant 0 : index
    %c0_37 = arith.constant 0 : index
    %c0_38 = arith.constant 0 : index
    %115 = vector.load %arg5[%c0_36, %c0_37, %c0_38] : memref<1x32x32xf32, #tpu.memory_space<vmem>>, vector<1x32x32xf32>
    %116 = vector.shape_cast %115 : vector<1x32x32xf32> to vector<32x32xf32>
    %cst_39 = arith.constant dense<0.000000e+00> : vector<16x32xf32>
    %117 = tpu.matmul %114, %116, %cst_39 {dimension_numbers = #tpu.dot_dimension_numbers<[1], [0], [0], [1], [0, 0, 1, 1], [], []>} : vector<16x32xf32>, vector<32x32xf32>, vector<16x32xf32> -> vector<16x32xf32>
    %c0_40 = arith.constant 0 : index
    %c0_41 = arith.constant 0 : index
    %c0_42 = arith.constant 0 : index
    %118 = vector.load %arg6[%c0_40, %c0_41, %c0_42] : memref<1x1x32xf32, #tpu.memory_space<vmem>>, vector<1x1x32xf32>
    %119 = vector.shape_cast %118 : vector<1x1x32xf32> to vector<1x32xf32>
    %120 = vector.broadcast %119 : vector<1x32xf32> to vector<16x32xf32>
    %121 = arith.addf %117, %120 : vector<16x32xf32>
    %122 = arith.addf %3, %121 : vector<16x32xf32>
    %c0_43 = arith.constant 0 : index
    %c0_44 = arith.constant 0 : index
    %c0_45 = arith.constant 0 : index
    %123 = vector.load %arg9[%c0_43, %c0_44, %c0_45] : memref<1x1x32xf32, #tpu.memory_space<vmem>>, vector<1x1x32xf32>
    %124 = vector.shape_cast %123 : vector<1x1x32xf32> to vector<1x32xf32>
    %c0_46 = arith.constant 0 : index
    %c0_47 = arith.constant 0 : index
    %c0_48 = arith.constant 0 : index
    %125 = vector.load %arg10[%c0_46, %c0_47, %c0_48] : memref<1x1x32xf32, #tpu.memory_space<vmem>>, vector<1x1x32xf32>
    %126 = vector.shape_cast %125 : vector<1x1x32xf32> to vector<1x32xf32>
    %cst_49 = arith.constant dense<0.000000e+00> : vector<16xf32>
    %127 = vector.multi_reduction <add>, %122, %cst_49 [1] : vector<16x32xf32> to vector<16xf32>
    %128 = vector.shape_cast %127 : vector<16xf32> to vector<16x1xf32>
    %cst_50 = arith.constant 3.200000e+01 : f32
    %129 = vector.broadcast %cst_50 : f32 to vector<16x1xf32>
    %130 = arith.divf %128, %129 : vector<16x1xf32>
    %131 = vector.broadcast %130 : vector<16x1xf32> to vector<16x32xf32>
    %132 = arith.subf %122, %131 : vector<16x32xf32>
    %133 = arith.mulf %132, %132 : vector<16x32xf32>
    %cst_51 = arith.constant dense<0.000000e+00> : vector<16xf32>
    %134 = vector.multi_reduction <add>, %133, %cst_51 [1] : vector<16x32xf32> to vector<16xf32>
    %135 = vector.shape_cast %134 : vector<16xf32> to vector<16x1xf32>
    %cst_52 = arith.constant 3.200000e+01 : f32
    %136 = vector.broadcast %cst_52 : f32 to vector<16x1xf32>
    %137 = arith.divf %135, %136 : vector<16x1xf32>
    %138 = vector.broadcast %130 : vector<16x1xf32> to vector<16x32xf32>
    %139 = arith.subf %122, %138 : vector<16x32xf32>
    %cst_53 = arith.constant 9.99999997E-7 : f32
    %140 = vector.broadcast %cst_53 : f32 to vector<16x1xf32>
    %141 = arith.addf %137, %140 : vector<16x1xf32>
    %142 = math.rsqrt %141 : vector<16x1xf32>
    %143 = vector.broadcast %142 : vector<16x1xf32> to vector<16x32xf32>
    %144 = arith.mulf %139, %143 : vector<16x32xf32>
    %145 = vector.broadcast %124 : vector<1x32xf32> to vector<16x32xf32>
    %146 = arith.mulf %144, %145 : vector<16x32xf32>
    %147 = vector.broadcast %126 : vector<1x32xf32> to vector<16x32xf32>
    %148 = arith.addf %146, %147 : vector<16x32xf32>
    %c0_54 = arith.constant 0 : index
    %c0_55 = arith.constant 0 : index
    %c0_56 = arith.constant 0 : index
    %149 = vector.load %arg11[%c0_54, %c0_55, %c0_56] : memref<1x32x64xf32, #tpu.memory_space<vmem>>, vector<1x32x64xf32>
    %150 = vector.shape_cast %149 : vector<1x32x64xf32> to vector<32x64xf32>
    %cst_57 = arith.constant dense<0.000000e+00> : vector<16x64xf32>
    %151 = tpu.matmul %148, %150, %cst_57 {dimension_numbers = #tpu.dot_dimension_numbers<[1], [0], [0], [1], [0, 0, 1, 1], [], []>} : vector<16x32xf32>, vector<32x64xf32>, vector<16x64xf32> -> vector<16x64xf32>
    %c0_58 = arith.constant 0 : index
    %c0_59 = arith.constant 0 : index
    %c0_60 = arith.constant 0 : index
    %152 = vector.load %arg12[%c0_58, %c0_59, %c0_60] : memref<1x1x64xf32, #tpu.memory_space<vmem>>, vector<1x1x64xf32>
    %153 = vector.shape_cast %152 : vector<1x1x64xf32> to vector<1x64xf32>
    %154 = vector.broadcast %153 : vector<1x64xf32> to vector<16x64xf32>
    %155 = arith.addf %151, %154 : vector<16x64xf32>
    %cst_61 = arith.constant 0.000000e+00 : f32
    %156 = vector.broadcast %cst_61 : f32 to vector<16x64xf32>
    %157 = arith.maximumf %155, %156 : vector<16x64xf32>
    %c0_62 = arith.constant 0 : index
    %c0_63 = arith.constant 0 : index
    %c0_64 = arith.constant 0 : index
    %158 = vector.load %arg13[%c0_62, %c0_63, %c0_64] : memref<1x64x32xf32, #tpu.memory_space<vmem>>, vector<1x64x32xf32>
    %159 = vector.shape_cast %158 : vector<1x64x32xf32> to vector<64x32xf32>
    %cst_65 = arith.constant dense<0.000000e+00> : vector<16x32xf32>
    %160 = tpu.matmul %157, %159, %cst_65 {dimension_numbers = #tpu.dot_dimension_numbers<[1], [0], [0], [1], [0, 0, 1, 1], [], []>} : vector<16x64xf32>, vector<64x32xf32>, vector<16x32xf32> -> vector<16x32xf32>
    %161 = arith.addf %122, %160 : vector<16x32xf32>
    %c0_66 = arith.constant 0 : index
    %c0_67 = arith.constant 0 : index
    %c0_68 = arith.constant 0 : index
    %162 = vector.load %arg14[%c0_66, %c0_67, %c0_68] : memref<1x1x32xf32, #tpu.memory_space<vmem>>, vector<1x1x32xf32>
    %163 = vector.shape_cast %162 : vector<1x1x32xf32> to vector<1x32xf32>
    %164 = vector.broadcast %163 : vector<1x32xf32> to vector<16x32xf32>
    %165 = arith.addf %161, %164 : vector<16x32xf32>
    %c0_69 = arith.constant 0 : index
    %c0_70 = arith.constant 0 : index
    %166 = vector.load %arg18[%c0_69, %c0_70] : memref<16x32xf32, #tpu.memory_space<vmem>>, vector<16x32xf32>
    tpu.vector_store %arg18[%c0_69, %c0_70], %165 {strides = array<i32>} : memref<16x32xf32, #tpu.memory_space<vmem>>, vector<16x32xf32>,
    %c1_i32 = arith.constant 1 : i32
    %167 = arith.cmpi eq, %arg1, %c1_i32 : i32
    %168 = arith.extui %167 : i1 to i32
    %c0_i32_71 = arith.constant 0 : i32
    %169 = arith.cmpi ne, %168, %c0_i32_71 : i32
    scf.if %169 {
      %c0_72 = arith.constant 0 : index
      %c0_73 = arith.constant 0 : index
      %170 = vector.load %arg18[%c0_72, %c0_73] : memref<16x32xf32, #tpu.memory_space<vmem>>, vector<16x32xf32>
      %c0_74 = arith.constant 0 : index
      %c0_75 = arith.constant 0 : index
      %171 = vector.load %arg15[%c0_74, %c0_75] : memref<1x32xf32, #tpu.memory_space<vmem>>, vector<1x32xf32>
      %c0_76 = arith.constant 0 : index
      %c0_77 = arith.constant 0 : index
      %172 = vector.load %arg16[%c0_76, %c0_77] : memref<1x32xf32, #tpu.memory_space<vmem>>, vector<1x32xf32>
      %cst_78 = arith.constant dense<0.000000e+00> : vector<16xf32>
      %173 = vector.multi_reduction <add>, %170, %cst_78 [1] : vector<16x32xf32> to vector<16xf32>
      %174 = vector.shape_cast %173 : vector<16xf32> to vector<16x1xf32>
      %cst_79 = arith.constant 3.200000e+01 : f32
      %175 = vector.broadcast %cst_79 : f32 to vector<16x1xf32>
      %176 = arith.divf %174, %175 : vector<16x1xf32>
      %177 = vector.broadcast %176 : vector<16x1xf32> to vector<16x32xf32>
      %178 = arith.subf %170, %177 : vector<16x32xf32>
      %179 = arith.mulf %178, %178 : vector<16x32xf32>
      %cst_80 = arith.constant dense<0.000000e+00> : vector<16xf32>
      %180 = vector.multi_reduction <add>, %179, %cst_80 [1] : vector<16x32xf32> to vector<16xf32>
      %181 = vector.shape_cast %180 : vector<16xf32> to vector<16x1xf32>
      %cst_81 = arith.constant 3.200000e+01 : f32
      %182 = vector.broadcast %cst_81 : f32 to vector<16x1xf32>
      %183 = arith.divf %181, %182 : vector<16x1xf32>
      %184 = vector.broadcast %176 : vector<16x1xf32> to vector<16x32xf32>
      %185 = arith.subf %170, %184 : vector<16x32xf32>
      %cst_82 = arith.constant 9.99999997E-7 : f32
      %186 = vector.broadcast %cst_82 : f32 to vector<16x1xf32>
      %187 = arith.addf %183, %186 : vector<16x1xf32>
      %188 = math.rsqrt %187 : vector<16x1xf32>
      %189 = vector.broadcast %188 : vector<16x1xf32> to vector<16x32xf32>
      %190 = arith.mulf %185, %189 : vector<16x32xf32>
      %191 = vector.broadcast %171 : vector<1x32xf32> to vector<16x32xf32>
      %192 = arith.mulf %190, %191 : vector<16x32xf32>
      %193 = vector.broadcast %172 : vector<1x32xf32> to vector<16x32xf32>
      %194 = arith.addf %192, %193 : vector<16x32xf32>
      %195 = vector.shape_cast %194 : vector<16x32xf32> to vector<2x8x32xf32>
      %c0_83 = arith.constant 0 : index
      %c0_84 = arith.constant 0 : index
      %c0_85 = arith.constant 0 : index
      %196 = vector.load %arg17[%c0_83, %c0_84, %c0_85] : memref<2x8x32xf32, #tpu.memory_space<vmem>>, vector<2x8x32xf32>
      tpu.vector_store %arg17[%c0_83, %c0_84, %c0_85], %195 {strides = array<i32>} : memref<2x8x32xf32, #tpu.memory_space<vmem>>, vector<2x8x32xf32>,
    } else {
    }
    return
  }
  func.func @transform_0(%arg0: i32, %arg1: i32) -> (i32, i32, i32) {
    %c0_i32 = arith.constant 0 : i32
    %c0_i32_0 = arith.constant 0 : i32
    %c0_i32_1 = arith.constant 0 : i32
    return %arg0, %c0_i32, %c0_i32_0 : i32, i32, i32
  }
  func.func @transform_1(%arg0: i32, %arg1: i32) -> (i32, i32, i32) {
    %c0_i32 = arith.constant 0 : i32
    %c0_i32_0 = arith.constant 0 : i32
    %c0_i32_1 = arith.constant 0 : i32
    return %arg1, %c0_i32, %c0_i32_0 : i32, i32, i32
  }
  func.func @transform_2(%arg0: i32, %arg1: i32) -> (i32, i32, i32) {
    %c0_i32 = arith.constant 0 : i32
    %c0_i32_0 = arith.constant 0 : i32
    %c0_i32_1 = arith.constant 0 : i32
    return %arg1, %c0_i32, %c0_i32_0 : i32, i32, i32
  }
  func.func @transform_3(%arg0: i32, %arg1: i32) -> (i32, i32, i32) {
    %c0_i32 = arith.constant 0 : i32
    %c0_i32_0 = arith.constant 0 : i32
    %c0_i32_1 = arith.constant 0 : i32
    return %arg1, %c0_i32, %c0_i32_0 : i32, i32, i32
  }
  func.func @transform_4(%arg0: i32, %arg1: i32) -> (i32, i32, i32) {
    %c0_i32 = arith.constant 0 : i32
    %c0_i32_0 = arith.constant 0 : i32
    %c0_i32_1 = arith.constant 0 : i32
    return %arg1, %c0_i32, %c0_i32_0 : i32, i32, i32
  }
  func.func @transform_5(%arg0: i32, %arg1: i32) -> (i32, i32, i32) {
    %c0_i32 = arith.constant 0 : i32
    %c0_i32_0 = arith.constant 0 : i32
    %c0_i32_1 = arith.constant 0 : i32
    return %arg1, %c0_i32, %c0_i32_0 : i32, i32, i32
  }
  func.func @transform_6(%arg0: i32, %arg1: i32) -> (i32, i32, i32) {
    %c0_i32 = arith.constant 0 : i32
    %c0_i32_0 = arith.constant 0 : i32
    %c0_i32_1 = arith.constant 0 : i32
    return %arg1, %c0_i32, %c0_i32_0 : i32, i32, i32
  }
  func.func @transform_7(%arg0: i32, %arg1: i32) -> (i32, i32, i32) {
    %c0_i32 = arith.constant 0 : i32
    %c0_i32_0 = arith.constant 0 : i32
    %c0_i32_1 = arith.constant 0 : i32
    return %arg1, %c0_i32, %c0_i32_0 : i32, i32, i32
  }
  func.func @transform_8(%arg0: i32, %arg1: i32) -> (i32, i32, i32) {
    %c0_i32 = arith.constant 0 : i32
    %c0_i32_0 = arith.constant 0 : i32
    %c0_i32_1 = arith.constant 0 : i32
    return %arg1, %c0_i32, %c0_i32_0 : i32, i32, i32
  }
  func.func @transform_9(%arg0: i32, %arg1: i32) -> (i32, i32, i32) {
    %c0_i32 = arith.constant 0 : i32
    %c0_i32_0 = arith.constant 0 : i32
    %c0_i32_1 = arith.constant 0 : i32
    return %arg1, %c0_i32, %c0_i32_0 : i32, i32, i32
  }
  func.func @transform_10(%arg0: i32, %arg1: i32) -> (i32, i32, i32) {
    %c0_i32 = arith.constant 0 : i32
    %c0_i32_0 = arith.constant 0 : i32
    %c0_i32_1 = arith.constant 0 : i32
    return %arg1, %c0_i32, %c0_i32_0 : i32, i32, i32
  }
  func.func @transform_11(%arg0: i32, %arg1: i32) -> (i32, i32, i32) {
    %c0_i32 = arith.constant 0 : i32
    %c0_i32_0 = arith.constant 0 : i32
    %c0_i32_1 = arith.constant 0 : i32
    return %arg1, %c0_i32, %c0_i32_0 : i32, i32, i32
  }
  func.func @transform_12(%arg0: i32, %arg1: i32) -> (i32, i32, i32) {
    %c0_i32 = arith.constant 0 : i32
    %c0_i32_0 = arith.constant 0 : i32
    %c0_i32_1 = arith.constant 0 : i32
    return %arg1, %c0_i32, %c0_i32_0 : i32, i32, i32
  }
  func.func @transform_13(%arg0: i32, %arg1: i32) -> (i32, i32) {
    %c0_i32 = arith.constant 0 : i32
    %c0_i32_0 = arith.constant 0 : i32
    %c0_i32_1 = arith.constant 0 : i32
    return %c0_i32, %c0_i32_0 : i32, i32
  }
  func.func @transform_14(%arg0: i32, %arg1: i32) -> (i32, i32) {
    %c0_i32 = arith.constant 0 : i32
    %c0_i32_0 = arith.constant 0 : i32
    %c0_i32_1 = arith.constant 0 : i32
    return %c0_i32, %c0_i32_0 : i32, i32
  }
  func.func @transform_15(%arg0: i32, %arg1: i32) -> (i32, i32, i32) {
    %c0_i32 = arith.constant 0 : i32
    %c0_i32_0 = arith.constant 0 : i32
    %c0_i32_1 = arith.constant 0 : i32
    return %arg0, %c0_i32, %c0_i32_0 : i32, i32, i32
  }
}

</mosaic_0001>

<llo_original>
// kernel: tpu_custom_call.1
$region0: #{tpu_custom_call.1}
  #allocation0 [shape = 'u32[]', space=smem, size = 0x4, offset = 0x4, fixed_abs, tag = 'smem constant byte address 0x4 - core index']
  #allocation1 [shape = 'u32[72,128]{1,0:T(1,128)}', space=vmem, size = 0x9000, scoped, tag = 'internal scratch']
  #allocation2 [shape = 'f32[16,32]{1,0:T(8,128)}', space=vmem, size = 0x2000, scoped, tag = 'scratch operand']
  %s0 = inlined_call_operand.hbm [shape: f32[2,8,32], index: 0, kind: input, shape index: {}]
  %s1 = inlined_call_operand.vmem [shape: f32[2,32,96], index: 1, kind: input, shape index: {}]
  %s2 = inlined_call_operand.hbm [shape: f32[2,1,96], index: 2, kind: input, shape index: {}]
  %s3 = inlined_call_operand.vmem [shape: f32[2,32,32], index: 3, kind: input, shape index: {}]
  %s4 = inlined_call_operand.vmem [shape: f32[2,1,32], index: 4, kind: input, shape index: {}]
  %s5 = inlined_call_operand.hbm [shape: f32[2,1,32], index: 5, kind: input, shape index: {}]
  %s6 = inlined_call_operand.vmem [shape: f32[2,1,32], index: 6, kind: input, shape index: {}]
  %s7 = inlined_call_operand.hbm [shape: f32[2,1,32], index: 7, kind: input, shape index: {}]
  %s8 = inlined_call_operand.hbm [shape: f32[2,1,32], index: 8, kind: input, shape index: {}]
  %s9 = inlined_call_operand.vmem [shape: f32[2,32,64], index: 9, kind: input, shape index: {}]
  %s10 = inlined_call_operand.vmem [shape: f32[2,1,64], index: 10, kind: input, shape index: {}]
  %s11 = inlined_call_operand.vmem [shape: f32[2,64,32], index: 11, kind: input, shape index: {}]
  %s12 = inlined_call_operand.vmem [shape: f32[2,1,32], index: 12, kind: input, shape index: {}]
  %s13 = inlined_call_operand.vmem [shape: f32[1,32], index: 13, kind: input, shape index: {}]
  %s14 = inlined_call_operand.vmem [shape: f32[1,32], index: 14, kind: input, shape index: {}]
  %s15 = inlined_call_operand.hbm [shape: f32[2,8,32], index: 15, kind: output, shape index: {}]
  %s16 = sld [smem:[#allocation0]]
  $region121: #{tpu_custom_call.1} parent=0
    _
  %s18 = ssub.s32 1, %s16
  %s19 = scalar_select 0, %s18, %s16
  $region1: #{tpu_custom_call.1} parent=0
    #allocation3 [shape = 'u8[8192]{0}', space=vmem, size = 0x2000, scoped, tag = 'input window, operand 0, single buffered']
    #allocation4 [shape = 's32[2]{0}', space=sflag, size = 0x8, scoped, tag = 'scoped memory for tpu_custom_call.1']
    #allocation5 [shape = 's32[2]{0}', space=sflag, size = 0x8, scoped, tag = 'scoped memory for tpu_custom_call.1']
    #allocation6 [shape = 'u8[1024]{0}', space=vmem, size = 0x400, scoped, tag = 'input window, operand 2']
    #allocation7 [shape = 's32[2]{0}', space=sflag, size = 0x8, scoped, tag = 'scoped memory for tpu_custom_call.1']
    #allocation8 [shape = 'u8[1024]{0}', space=vmem, size = 0x400, scoped, tag = 'input window, operand 5']
    #allocation9 [shape = 'u8[1024]{0}', space=vmem, size = 0x400, scoped, tag = 'input window, operand 7']
    #allocation10 [shape = 's32[2]{0}', space=sflag, size = 0x8, scoped, tag = 'scoped memory for tpu_custom_call.1']
    #allocation11 [shape = 'u8[1024]{0}', space=vmem, size = 0x400, scoped, tag = 'input window, operand 8']
    #allocation12 [shape = 'u8[8192]{0}', space=vmem, size = 0x2000, scoped, tag = 'output window, operand 0, single buffered']
    %20 = vsyncpa [#allocation4], 0
    %21 = vsyncpa [#allocation7], 0
    %s22 = scalar_lea.sflag [#allocation7], 1
    %23 = vsyncpa %s22, 0
    %24 = vsyncpa [#allocation10], 0
    %s25 = scalar_lea.sflag [#allocation10], 1
    %26 = vsyncpa %s25, 0
    %27 = vsyncpa [#allocation5], 0
    loop: start=0, step=1, limit=4
    $region2: #{tpu_custom_call.1} parent=1 // loop_pre_header
      _
    $region3: #{tpu_custom_call.1} parent=1 // loop_header
      %s29 = sphi 0, %s33
      %p30 = scmp.ge.s32.totalorder %s29, 4
      %s36 = sphi 0, %s48
      %s37 = sphi 0, %s44
      %s38 = sphi 0, %s36
      %s39 = sphi 0, %s37
      %s40 = sphi 0, %s38
      %s41 = sphi 0, %s39
      %s51 = sphi 0, %s53
      %s54 = sphi 0, %s51
      %s55 = sphi 0, %s54
      %s71 = sphi 0, %s55
      %s77 = sphi 0, %s79
      %s80 = sphi 0, %s77
      %s81 = sphi 0, %s80
      %s97 = sphi 0, %s81
      %s103 = sphi 0, %s105
      %s106 = sphi 0, %s103
      %s107 = sphi 0, %s106
      %s123 = sphi 0, %s107
      %s129 = sphi 0, %s131
      %s132 = sphi 0, %s129
      %s133 = sphi 0, %s132
      %s149 = sphi 0, %s133
      %s155 = sphi 0, %s157
      %s158 = sphi 0, %s155
      %s159 = sphi 0, %s158
      %s175 = sphi 0, %s159
      %s181 = sphi 0, %s183
      %s184 = sphi 0, %s181
      %s185 = sphi 0, %s184
      %s201 = sphi 0, %s185
      %s207 = sphi 0, %s209
      %s210 = sphi 0, %s207
      %s211 = sphi 0, %s210
      %s227 = sphi 0, %s211
      %s233 = sphi 0, %s235
      %s236 = sphi 0, %s233
      %s237 = sphi 0, %s236
      %s253 = sphi 0, %s237
      %s259 = sphi 0, %s261
      %s262 = sphi 0, %s259
      %s263 = sphi 0, %s262
      %s279 = sphi 0, %s263
      %s285 = sphi 0, %s287
      %s288 = sphi 0, %s285
      %s289 = sphi 0, %s288
      %s305 = sphi 0, %s289
      %s311 = sphi 0, %s313
      %s314 = sphi 0, %s311
      %s315 = sphi 0, %s314
      %s331 = sphi 0, %s315
      %s337 = sphi 0, %s339
      %s340 = sphi 0, %s337
      %s341 = sphi 0, %s340
      %s357 = sphi 0, %s341
      %s363 = sphi 0, %s365
      %s366 = sphi 0, %s363
      %s367 = sphi 0, %s366
      %s383 = sphi 0, %s367
      %s387 = sphi 0, %s387
      %s389 = sphi 0, %s387
      %s390 = sphi 0, %s389
      %s404 = sphi 0, %s390
      %s408 = sphi 0, %s408
      %s410 = sphi 0, %s408
      %s411 = sphi 0, %s410
      %s425 = sphi 0, %s411
      %s431 = sphi 0, %s433
      %s434 = sphi 0, %s431
      %s435 = sphi 0, %s434
      %s451 = sphi 0, %s435
    $region4: #{tpu_custom_call.1} parent=1 // loop_header_branch
      %32 = sbr.rel (%p30) target = $region8
    $region5: #{tpu_custom_call.1} parent=1 // loop_body
      %s34 = ssub.s32 %s29, 1
      %s35 = ssub.s32 %s29, 2
      %s42 = sadd.s32 1, %s37
      %p43 = scmp.ge.s32.totalorder %s42, 2
      %s44 = scalar_select %p43, 0, %s42
      %s45 = sadd.s32 1, %s36
      %s46 = scalar_select %p43, %s45, %s36
      %p47 = scmp.ge.s32.totalorder %s46, 1
      %s48 = scalar_select %p47, 0, %s46
      %s49 = ssub.s32 %s36, %s48
      %p50 = scmp.eq.s32.totalorder %s49, 0
      %s52 = sadd.s32 %s51, 1
      %s53 = scalar_select %p50, %s51, %s52
      %p56 = pneg %p50
      %p57 = scmp.eq.s32.totalorder %s29, 1
      %p58 = por %p56, %p57
      %p59 = scmp.ne.s32.totalorder %s51, %s54
      %p60 = scmp.eq.s32.totalorder %s29, 0
      %p61 = por %p59, %p60
      %p62 = scmp.ne.s32.totalorder %s51, %s54
      %p63 = scmp.eq.s32.totalorder %s34, 1
      %p64 = por %p62, %p63
      %p65 = scmp.ne.s32.totalorder %s54, %s55
      %p66 = scmp.eq.s32.totalorder %s34, 0
      %p67 = por %p65, %p66
      %p68 = scmp.ne.s32.totalorder %s54, %s55
      %p69 = scmp.eq.s32.totalorder %s35, 1
      %p70 = por %p68, %p69
      %p72 = scmp.ne.s32.totalorder %s55, %s71
      %p73 = scmp.eq.s32.totalorder %s35, 0
      %p74 = por %p72, %p73
      %s75 = ssub.s32 %s37, %s44
      %p76 = scmp.eq.s32.totalorder %s75, 0
      %s78 = sadd.s32 %s77, 1
      %s79 = scalar_select %p76, %s77, %s78
      %p82 = pneg %p76
      %p83 = scmp.eq.s32.totalorder %s29, 1
      %p84 = por %p82, %p83
      %p85 = scmp.ne.s32.totalorder %s77, %s80
      %p86 = scmp.eq.s32.totalorder %s29, 0
      %p87 = por %p85, %p86
      %p88 = scmp.ne.s32.totalorder %s77, %s80
      %p89 = scmp.eq.s32.totalorder %s34, 1
      %p90 = por %p88, %p89
      %p91 = scmp.ne.s32.totalorder %s80, %s81
      %p92 = scmp.eq.s32.totalorder %s34, 0
      %p93 = por %p91, %p92
      %p94 = scmp.ne.s32.totalorder %s80, %s81
      %p95 = scmp.eq.s32.totalorder %s35, 1
      %p96 = por %p94, %p95
      %p98 = scmp.ne.s32.totalorder %s81, %s97
      %p99 = scmp.eq.s32.totalorder %s35, 0
      %p100 = por %p98, %p99
      %s101 = ssub.s32 %s37, %s44
      %p102 = scmp.eq.s32.totalorder %s101, 0
      %s104 = sadd.s32 %s103, 1
      %s105 = scalar_select %p102, %s103, %s104
      %p108 = pneg %p102
      %p109 = scmp.eq.s32.totalorder %s29, 1
      %p110 = por %p108, %p109
      %p111 = scmp.ne.s32.totalorder %s103, %s106
      %p112 = scmp.eq.s32.totalorder %s29, 0
      %p113 = por %p111, %p112
      %p114 = scmp.ne.s32.totalorder %s103, %s106
      %p115 = scmp.eq.s32.totalorder %s34, 1
      %p116 = por %p114, %p115
      %p117 = scmp.ne.s32.totalorder %s106, %s107
      %p118 = scmp.eq.s32.totalorder %s34, 0
      %p119 = por %p117, %p118
      %p120 = scmp.ne.s32.totalorder %s106, %s107
      %p121 = scmp.eq.s32.totalorder %s35, 1
      %p122 = por %p120, %p121
      %p124 = scmp.ne.s32.totalorder %s107, %s123
      %p125 = scmp.eq.s32.totalorder %s35, 0
      %p126 = por %p124, %p125
      %s127 = ssub.s32 %s37, %s44
      %p128 = scmp.eq.s32.totalorder %s127, 0
      %s130 = sadd.s32 %s129, 1
      %s131 = scalar_select %p128, %s129, %s130
      %p134 = pneg %p128
      %p135 = scmp.eq.s32.totalorder %s29, 1
      %p136 = por %p134, %p135
      %p137 = scmp.ne.s32.totalorder %s129, %s132
      %p138 = scmp.eq.s32.totalorder %s29, 0
      %p139 = por %p137, %p138
      %p140 = scmp.ne.s32.totalorder %s129, %s132
      %p141 = scmp.eq.s32.totalorder %s34, 1
      %p142 = por %p140, %p141
      %p143 = scmp.ne.s32.totalorder %s132, %s133
      %p144 = scmp.eq.s32.totalorder %s34, 0
      %p145 = por %p143, %p144
      %p146 = scmp.ne.s32.totalorder %s132, %s133
      %p147 = scmp.eq.s32.totalorder %s35, 1
      %p148 = por %p146, %p147
      %p150 = scmp.ne.s32.totalorder %s133, %s149
      %p151 = scmp.eq.s32.totalorder %s35, 0
      %p152 = por %p150, %p151
      %s153 = ssub.s32 %s37, %s44
      %p154 = scmp.eq.s32.totalorder %s153, 0
      %s156 = sadd.s32 %s155, 1
      %s157 = scalar_select %p154, %s155, %s156
      %p160 = pneg %p154
      %p161 = scmp.eq.s32.totalorder %s29, 1
      %p162 = por %p160, %p161
      %p163 = scmp.ne.s32.totalorder %s155, %s158
      %p164 = scmp.eq.s32.totalorder %s29, 0
      %p165 = por %p163, %p164
      %p166 = scmp.ne.s32.totalorder %s155, %s158
      %p167 = scmp.eq.s32.totalorder %s34, 1
      %p168 = por %p166, %p167
      %p169 = scmp.ne.s32.totalorder %s158, %s159
      %p170 = scmp.eq.s32.totalorder %s34, 0
      %p171 = por %p169, %p170
      %p172 = scmp.ne.s32.totalorder %s158, %s159
      %p173 = scmp.eq.s32.totalorder %s35, 1
      %p174 = por %p172, %p173
      %p176 = scmp.ne.s32.totalorder %s159, %s175
      %p177 = scmp.eq.s32.totalorder %s35, 0
      %p178 = por %p176, %p177
      %s179 = ssub.s32 %s37, %s44
      %p180 = scmp.eq.s32.totalorder %s179, 0
      %s182 = sadd.s32 %s181, 1
      %s183 = scalar_select %p180, %s181, %s182
      %p186 = pneg %p180
      %p187 = scmp.eq.s32.totalorder %s29, 1
      %p188 = por %p186, %p187
      %p189 = scmp.ne.s32.totalorder %s181, %s184
      %p190 = scmp.eq.s32.totalorder %s29, 0
      %p191 = por %p189, %p190
      %p192 = scmp.ne.s32.totalorder %s181, %s184
      %p193 = scmp.eq.s32.totalorder %s34, 1
      %p194 = por %p192, %p193
      %p195 = scmp.ne.s32.totalorder %s184, %s185
      %p196 = scmp.eq.s32.totalorder %s34, 0
      %p197 = por %p195, %p196
      %p198 = scmp.ne.s32.totalorder %s184, %s185
      %p199 = scmp.eq.s32.totalorder %s35, 1
      %p200 = por %p198, %p199
      %p202 = scmp.ne.s32.totalorder %s185, %s201
      %p203 = scmp.eq.s32.totalorder %s35, 0
      %p204 = por %p202, %p203
      %s205 = ssub.s32 %s37, %s44
      %p206 = scmp.eq.s32.totalorder %s205, 0
      %s208 = sadd.s32 %s207, 1
      %s209 = scalar_select %p206, %s207, %s208
      %p212 = pneg %p206
      %p213 = scmp.eq.s32.totalorder %s29, 1
      %p214 = por %p212, %p213
      %p215 = scmp.ne.s32.totalorder %s207, %s210
      %p216 = scmp.eq.s32.totalorder %s29, 0
      %p217 = por %p215, %p216
      %p218 = scmp.ne.s32.totalorder %s207, %s210
      %p219 = scmp.eq.s32.totalorder %s34, 1
      %p220 = por %p218, %p219
      %p221 = scmp.ne.s32.totalorder %s210, %s211
      %p222 = scmp.eq.s32.totalorder %s34, 0
      %p223 = por %p221, %p222
      %p224 = scmp.ne.s32.totalorder %s210, %s211
      %p225 = scmp.eq.s32.totalorder %s35, 1
      %p226 = por %p224, %p225
      %p228 = scmp.ne.s32.totalorder %s211, %s227
      %p229 = scmp.eq.s32.totalorder %s35, 0
      %p230 = por %p228, %p229
      %s231 = ssub.s32 %s37, %s44
      %p232 = scmp.eq.s32.totalorder %s231, 0
      %s234 = sadd.s32 %s233, 1
      %s235 = scalar_select %p232, %s233, %s234
      %p238 = pneg %p232
      %p239 = scmp.eq.s32.totalorder %s29, 1
      %p240 = por %p238, %p239
      %p241 = scmp.ne.s32.totalorder %s233, %s236
      %p242 = scmp.eq.s32.totalorder %s29, 0
      %p243 = por %p241, %p242
      %p244 = scmp.ne.s32.totalorder %s233, %s236
      %p245 = scmp.eq.s32.totalorder %s34, 1
      %p246 = por %p244, %p245
      %p247 = scmp.ne.s32.totalorder %s236, %s237
      %p248 = scmp.eq.s32.totalorder %s34, 0
      %p249 = por %p247, %p248
      %p250 = scmp.ne.s32.totalorder %s236, %s237
      %p251 = scmp.eq.s32.totalorder %s35, 1
      %p252 = por %p250, %p251
      %p254 = scmp.ne.s32.totalorder %s237, %s253
      %p255 = scmp.eq.s32.totalorder %s35, 0
      %p256 = por %p254, %p255
      %s257 = ssub.s32 %s37, %s44
      %p258 = scmp.eq.s32.totalorder %s257, 0
      %s260 = sadd.s32 %s259, 1
      %s261 = scalar_select %p258, %s259, %s260
      %p264 = pneg %p258
      %p265 = scmp.eq.s32.totalorder %s29, 1
      %p266 = por %p264, %p265
      %p267 = scmp.ne.s32.totalorder %s259, %s262
      %p268 = scmp.eq.s32.totalorder %s29, 0
      %p269 = por %p267, %p268
      %p270 = scmp.ne.s32.totalorder %s259, %s262
      %p271 = scmp.eq.s32.totalorder %s34, 1
      %p272 = por %p270, %p271
      %p273 = scmp.ne.s32.totalorder %s262, %s263
      %p274 = scmp.eq.s32.totalorder %s34, 0
      %p275 = por %p273, %p274
      %p276 = scmp.ne.s32.totalorder %s262, %s263
      %p277 = scmp.eq.s32.totalorder %s35, 1
      %p278 = por %p276, %p277
      %p280 = scmp.ne.s32.totalorder %s263, %s279
      %p281 = scmp.eq.s32.totalorder %s35, 0
      %p282 = por %p280, %p281
      %s283 = ssub.s32 %s37, %s44
      %p284 = scmp.eq.s32.totalorder %s283, 0
      %s286 = sadd.s32 %s285, 1
      %s287 = scalar_select %p284, %s285, %s286
      %p290 = pneg %p284
      %p291 = scmp.eq.s32.totalorder %s29, 1
      %p292 = por %p290, %p291
      %p293 = scmp.ne.s32.totalorder %s285, %s288
      %p294 = scmp.eq.s32.totalorder %s29, 0
      %p295 = por %p293, %p294
      %p296 = scmp.ne.s32.totalorder %s285, %s288
      %p297 = scmp.eq.s32.totalorder %s34, 1
      %p298 = por %p296, %p297
      %p299 = scmp.ne.s32.totalorder %s288, %s289
      %p300 = scmp.eq.s32.totalorder %s34, 0
      %p301 = por %p299, %p300
      %p302 = scmp.ne.s32.totalorder %s288, %s289
      %p303 = scmp.eq.s32.totalorder %s35, 1
      %p304 = por %p302, %p303
      %p306 = scmp.ne.s32.totalorder %s289, %s305
      %p307 = scmp.eq.s32.totalorder %s35, 0
      %p308 = por %p306, %p307
      %s309 = ssub.s32 %s37, %s44
      %p310 = scmp.eq.s32.totalorder %s309, 0
      %s312 = sadd.s32 %s311, 1
      %s313 = scalar_select %p310, %s311, %s312
      %p316 = pneg %p310
      %p317 = scmp.eq.s32.totalorder %s29, 1
      %p318 = por %p316, %p317
      %p319 = scmp.ne.s32.totalorder %s311, %s314
      %p320 = scmp.eq.s32.totalorder %s29, 0
      %p321 = por %p319, %p320
      %p322 = scmp.ne.s32.totalorder %s311, %s314
      %p323 = scmp.eq.s32.totalorder %s34, 1
      %p324 = por %p322, %p323
      %p325 = scmp.ne.s32.totalorder %s314, %s315
      %p326 = scmp.eq.s32.totalorder %s34, 0
      %p327 = por %p325, %p326
      %p328 = scmp.ne.s32.totalorder %s314, %s315
      %p329 = scmp.eq.s32.totalorder %s35, 1
      %p330 = por %p328, %p329
      %p332 = scmp.ne.s32.totalorder %s315, %s331
      %p333 = scmp.eq.s32.totalorder %s35, 0
      %p334 = por %p332, %p333
      %s335 = ssub.s32 %s37, %s44
      %p336 = scmp.eq.s32.totalorder %s335, 0
      %s338 = sadd.s32 %s337, 1
      %s339 = scalar_select %p336, %s337, %s338
      %p342 = pneg %p336
      %p343 = scmp.eq.s32.totalorder %s29, 1
      %p344 = por %p342, %p343
      %p345 = scmp.ne.s32.totalorder %s337, %s340
      %p346 = scmp.eq.s32.totalorder %s29, 0
      %p347 = por %p345, %p346
      %p348 = scmp.ne.s32.totalorder %s337, %s340
      %p349 = scmp.eq.s32.totalorder %s34, 1
      %p350 = por %p348, %p349
      %p351 = scmp.ne.s32.totalorder %s340, %s341
      %p352 = scmp.eq.s32.totalorder %s34, 0
      %p353 = por %p351, %p352
      %p354 = scmp.ne.s32.totalorder %s340, %s341
      %p355 = scmp.eq.s32.totalorder %s35, 1
      %p356 = por %p354, %p355
      %p358 = scmp.ne.s32.totalorder %s341, %s357
      %p359 = scmp.eq.s32.totalorder %s35, 0
      %p360 = por %p358, %p359
      %s361 = ssub.s32 %s37, %s44
      %p362 = scmp.eq.s32.totalorder %s361, 0
      %s364 = sadd.s32 %s363, 1
      %s365 = scalar_select %p362, %s363, %s364
      %p368 = pneg %p362
      %p369 = scmp.eq.s32.totalorder %s29, 1
      %p370 = por %p368, %p369
      %p371 = scmp.ne.s32.totalorder %s363, %s366
      %p372 = scmp.eq.s32.totalorder %s29, 0
      %p373 = por %p371, %p372
      %p374 = scmp.ne.s32.totalorder %s363, %s366
      %p375 = scmp.eq.s32.totalorder %s34, 1
      %p376 = por %p374, %p375
      %p377 = scmp.ne.s32.totalorder %s366, %s367
      %p378 = scmp.eq.s32.totalorder %s34, 0
      %p379 = por %p377, %p378
      %p380 = scmp.ne.s32.totalorder %s366, %s367
      %p381 = scmp.eq.s32.totalorder %s35, 1
      %p382 = por %p380, %p381
      %p384 = scmp.ne.s32.totalorder %s367, %s383
      %p385 = scmp.eq.s32.totalorder %s35, 0
      %p386 = por %p384, %p385
      %s388 = sadd.s32 %s387, 1
      %p391 = scmp.eq.s32.totalorder %s29, 1
      %p392 = scmp.ne.s32.totalorder %s387, %s389
      %p393 = scmp.eq.s32.totalorder %s29, 0
      %p394 = por %p392, %p393
      %p395 = scmp.ne.s32.totalorder %s387, %s389
      %p396 = scmp.eq.s32.totalorder %s34, 1
      %p397 = por %p395, %p396
      %p398 = scmp.ne.s32.totalorder %s389, %s390
      %p399 = scmp.eq.s32.totalorder %s34, 0
      %p400 = por %p398, %p399
      %p401 = scmp.ne.s32.totalorder %s389, %s390
      %p402 = scmp.eq.s32.totalorder %s35, 1
      %p403 = por %p401, %p402
      %p405 = scmp.ne.s32.totalorder %s390, %s404
      %p406 = scmp.eq.s32.totalorder %s35, 0
      %p407 = por %p405, %p406
      %s409 = sadd.s32 %s408, 1
      %p412 = scmp.eq.s32.totalorder %s29, 1
      %p413 = scmp.ne.s32.totalorder %s408, %s410
      %p414 = scmp.eq.s32.totalorder %s29, 0
      %p415 = por %p413, %p414
      %p416 = scmp.ne.s32.totalorder %s408, %s410
      %p417 = scmp.eq.s32.totalorder %s34, 1
      %p418 = por %p416, %p417
      %p419 = scmp.ne.s32.totalorder %s410, %s411
      %p420 = scmp.eq.s32.totalorder %s34, 0
      %p421 = por %p419, %p420
      %p422 = scmp.ne.s32.totalorder %s410, %s411
      %p423 = scmp.eq.s32.totalorder %s35, 1
      %p424 = por %p422, %p423
      %p426 = scmp.ne.s32.totalorder %s411, %s425
      %p427 = scmp.eq.s32.totalorder %s35, 0
      %p428 = por %p426, %p427
      %s429 = ssub.s32 %s36, %s48
      %p430 = scmp.eq.s32.totalorder %s429, 0
      %s432 = sadd.s32 %s431, 1
      %s433 = scalar_select %p430, %s431, %s432
      %p436 = pneg %p430
      %p437 = scmp.eq.s32.totalorder %s29, 1
      %p438 = por %p436, %p437
      %p439 = scmp.ne.s32.totalorder %s431, %s434
      %p440 = scmp.eq.s32.totalorder %s29, 0
      %p441 = por %p439, %p440
      %p442 = scmp.ne.s32.totalorder %s431, %s434
      %p443 = scmp.eq.s32.totalorder %s34, 1
      %p444 = por %p442, %p443
      %p445 = scmp.ne.s32.totalorder %s434, %s435
      %p446 = scmp.eq.s32.totalorder %s34, 0
      %p447 = por %p445, %p446
      %p448 = scmp.ne.s32.totalorder %s434, %s435
      %p449 = scmp.eq.s32.totalorder %s35, 1
      %p450 = por %p448, %p449
      %p452 = scmp.ne.s32.totalorder %s435, %s451
      %p453 = scmp.eq.s32.totalorder %s35, 0
      %p454 = por %p452, %p453
      %p455 = scmp.le.s32.totalorder 1, %s29
      %p456 = scmp.lt.s32.totalorder %s29, 3
      %p457 = pnand %p455, %p456
      %p458 = pneg %p457
      // Predicated region
      $region9: #{tpu_custom_call.1} parent=5 // pred_check
        _
      $region10: #{tpu_custom_call.1} parent=5 // pred_check_branch
        %460 = sbr.rel (%p457) target = $region12
      $region11: #{tpu_custom_call.1} parent=5 // pred_region
        %s461 = ssub.s32 %s29, 1
        // Predicated region
        $region13: #{tpu_custom_call.1} parent=11 // pred_check
          %p462 = pneg %p67
        $region14: #{tpu_custom_call.1} parent=11 // pred_check_branch
          %464 = sbr.rel (%p462) target = $region16
        $region15: #{tpu_custom_call.1} parent=11 // pred_region
          %s465 = smul.u32 2, %s38
          %467 = vsyncadd [#allocation4], 0
          %s468 = smul.addr %s465, 8
          %s469 = scalar_lea.hbm %s0, %s468
          %s470 = sshll.u32 %s469, 4
          %s471 = int_to_ptr.hbm [resolvable:$true] %s470
          %s472 = sshll.u32 [#allocation3], 4
          %s473 = int_to_ptr.vmem [resolvable:$true] %s472
          %478 = dma.hbm_to_vmem [thread:$0]  %s471, 256, %s473, [#allocation4], 128, 128, 8
        $region16: #{tpu_custom_call.1} parent=11 // pred_fallthru
          _
        // Predicated region
        $region17: #{tpu_custom_call.1} parent=11 // pred_check
          %p479 = pneg %p400
        $region18: #{tpu_custom_call.1} parent=11 // pred_check_branch
          %481 = sbr.rel (%p479) target = $region20
        $region19: #{tpu_custom_call.1} parent=11 // pred_region
          _
        $region20: #{tpu_custom_call.1} parent=11 // pred_fallthru
          _
        // Predicated region
        $region21: #{tpu_custom_call.1} parent=11 // pred_check
          %p482 = pneg %p421
        $region22: #{tpu_custom_call.1} parent=11 // pred_check_branch
          %484 = sbr.rel (%p482) target = $region24
        $region23: #{tpu_custom_call.1} parent=11 // pred_region
          _
        $region24: #{tpu_custom_call.1} parent=11 // pred_fallthru
          _
      $region12: #{tpu_custom_call.1} parent=5 // pred_fallthru
        _
      %p485 = scmp.lt.s32.totalorder %s29, 2
      // Predicated region
      $region25: #{tpu_custom_call.1} parent=5 // pred_check
        %p486 = pneg %p485
      $region26: #{tpu_custom_call.1} parent=5 // pred_check_branch
        %488 = sbr.rel (%p486) target = $region28
      $region27: #{tpu_custom_call.1} parent=5 // pred_region
        // Predicated region
        $region29: #{tpu_custom_call.1} parent=27 // pred_check
          %p489 = pneg %p87
        $region30: #{tpu_custom_call.1} parent=27 // pred_check_branch
          %491 = sbr.rel (%p489) target = $region32
        $region31: #{tpu_custom_call.1} parent=27 // pred_region
          %p492 = scmp.lt.s32.totalorder %s37, 1
          %s493 = scalar_select %p492, %s37, 1
          %s494 = smul.addr %s493, 4
          %s495 = smul.addr %s494, 8
          %s496 = scalar_lea.vmem %s1, %s495
        $region32: #{tpu_custom_call.1} parent=27 // pred_fallthru
          _
        // Predicated region
        $region33: #{tpu_custom_call.1} parent=27 // pred_check
          %p497 = pneg %p113
        $region34: #{tpu_custom_call.1} parent=27 // pred_check_branch
          %499 = sbr.rel (%p497) target = $region36
        $region35: #{tpu_custom_call.1} parent=27 // pred_region
          %s500 = sand.u32 %s29, 1
          %s501 = scalar_lea.sflag [#allocation7], %s500
          %s502 = sand.u32 %s103, 1
          %s503 = scalar_lea.vmem [#allocation6], %s502
          %505 = vsyncadd %s501, 0
          %s506 = scalar_lea.hbm %s2, %s37
          %s508 = sshll.u32 %s506, 4
          %s509 = int_to_ptr.hbm [resolvable:$true] %s508
          %s510 = sshll.u32 %s503, 4
          %s511 = int_to_ptr.vmem [resolvable:$true] %s510
          %513 = dma.hbm_to_vmem [thread:$0]  %s509, 16, %s511, %s501
        $region36: #{tpu_custom_call.1} parent=27 // pred_fallthru
          _
        // Predicated region
        $region37: #{tpu_custom_call.1} parent=27 // pred_check
          %p514 = pneg %p139
        $region38: #{tpu_custom_call.1} parent=27 // pred_check_branch
          %516 = sbr.rel (%p514) target = $region40
        $region39: #{tpu_custom_call.1} parent=27 // pred_region
          %p517 = scmp.lt.s32.totalorder %s37, 1
          %s518 = scalar_select %p517, %s37, 1
          %s519 = smul.addr %s518, 4
          %s520 = smul.addr %s519, 8
          %s521 = scalar_lea.vmem %s3, %s520
        $region40: #{tpu_custom_call.1} parent=27 // pred_fallthru
          _
        // Predicated region
        $region41: #{tpu_custom_call.1} parent=27 // pred_check
          %p522 = pneg %p165
        $region42: #{tpu_custom_call.1} parent=27 // pred_check_branch
          %524 = sbr.rel (%p522) target = $region44
        $region43: #{tpu_custom_call.1} parent=27 // pred_region
          %p525 = scmp.lt.s32.totalorder %s37, 1
          %s526 = scalar_select %p525, %s37, 1
          %s527 = scalar_lea.vmem %s4, %s526
        $region44: #{tpu_custom_call.1} parent=27 // pred_fallthru
          _
        // Predicated region
        $region45: #{tpu_custom_call.1} parent=27 // pred_check
          %p528 = pneg %p191
        $region46: #{tpu_custom_call.1} parent=27 // pred_check_branch
          %530 = sbr.rel (%p528) target = $region48
        $region47: #{tpu_custom_call.1} parent=27 // pred_region
          %s531 = sand.u32 %s29, 1
          %s532 = scalar_lea.sflag [#allocation7], %s531
          %s533 = sand.u32 %s181, 1
          %s534 = scalar_lea.vmem [#allocation8], %s533
          %536 = vsyncadd %s532, 0
          %s537 = scalar_lea.hbm %s5, %s37
          %s539 = sshll.u32 %s537, 4
          %s540 = int_to_ptr.hbm [resolvable:$true] %s539
          %s541 = sshll.u32 %s534, 4
          %s542 = int_to_ptr.vmem [resolvable:$true] %s541
          %544 = dma.hbm_to_vmem [thread:$0]  %s540, 16, %s542, %s532
        $region48: #{tpu_custom_call.1} parent=27 // pred_fallthru
          _
        // Predicated region
        $region49: #{tpu_custom_call.1} parent=27 // pred_check
          %p545 = pneg %p217
        $region50: #{tpu_custom_call.1} parent=27 // pred_check_branch
          %547 = sbr.rel (%p545) target = $region52
        $region51: #{tpu_custom_call.1} parent=27 // pred_region
          %p548 = scmp.lt.s32.totalorder %s37, 1
          %s549 = scalar_select %p548, %s37, 1
          %s550 = scalar_lea.vmem %s6, %s549
        $region52: #{tpu_custom_call.1} parent=27 // pred_fallthru
          _
        // Predicated region
        $region53: #{tpu_custom_call.1} parent=27 // pred_check
          %p551 = pneg %p243
        $region54: #{tpu_custom_call.1} parent=27 // pred_check_branch
          %553 = sbr.rel (%p551) target = $region56
        $region55: #{tpu_custom_call.1} parent=27 // pred_region
          %s554 = sand.u32 %s29, 1
          %s555 = scalar_lea.sflag [#allocation10], %s554
          %s556 = sand.u32 %s233, 1
          %s557 = scalar_lea.vmem [#allocation9], %s556
          %559 = vsyncadd %s555, 0
          %s560 = scalar_lea.hbm %s7, %s37
          %s562 = sshll.u32 %s560, 4
          %s563 = int_to_ptr.hbm [resolvable:$true] %s562
          %s564 = sshll.u32 %s557, 4
          %s565 = int_to_ptr.vmem [resolvable:$true] %s564
          %567 = dma.hbm_to_vmem [thread:$0]  %s563, 16, %s565, %s555
        $region56: #{tpu_custom_call.1} parent=27 // pred_fallthru
          _
        // Predicated region
        $region57: #{tpu_custom_call.1} parent=27 // pred_check
          %p568 = pneg %p269
        $region58: #{tpu_custom_call.1} parent=27 // pred_check_branch
          %570 = sbr.rel (%p568) target = $region60
        $region59: #{tpu_custom_call.1} parent=27 // pred_region
          %s571 = sand.u32 %s29, 1
          %s572 = scalar_lea.sflag [#allocation10], %s571
          %s573 = sand.u32 %s259, 1
          %s574 = scalar_lea.vmem [#allocation11], %s573
          %576 = vsyncadd %s572, 0
          %s577 = scalar_lea.hbm %s8, %s37
          %s579 = sshll.u32 %s577, 4
          %s580 = int_to_ptr.hbm [resolvable:$true] %s579
          %s581 = sshll.u32 %s574, 4
          %s582 = int_to_ptr.vmem [resolvable:$true] %s581
          %584 = dma.hbm_to_vmem [thread:$0]  %s580, 16, %s582, %s572
        $region60: #{tpu_custom_call.1} parent=27 // pred_fallthru
          _
        // Predicated region
        $region61: #{tpu_custom_call.1} parent=27 // pred_check
          %p585 = pneg %p295
        $region62: #{tpu_custom_call.1} parent=27 // pred_check_branch
          %587 = sbr.rel (%p585) target = $region64
        $region63: #{tpu_custom_call.1} parent=27 // pred_region
          %p588 = scmp.lt.s32.totalorder %s37, 1
          %s589 = scalar_select %p588, %s37, 1
          %s590 = smul.addr %s589, 4
          %s591 = smul.addr %s590, 8
          %s592 = scalar_lea.vmem %s9, %s591
        $region64: #{tpu_custom_call.1} parent=27 // pred_fallthru
          _
        // Predicated region
        $region65: #{tpu_custom_call.1} parent=27 // pred_check
          %p593 = pneg %p321
        $region66: #{tpu_custom_call.1} parent=27 // pred_check_branch
          %595 = sbr.rel (%p593) target = $region68
        $region67: #{tpu_custom_call.1} parent=27 // pred_region
          %p596 = scmp.lt.s32.totalorder %s37, 1
          %s597 = scalar_select %p596, %s37, 1
          %s598 = scalar_lea.vmem %s10, %s597
        $region68: #{tpu_custom_call.1} parent=27 // pred_fallthru
          _
        // Predicated region
        $region69: #{tpu_custom_call.1} parent=27 // pred_check
          %p599 = pneg %p347
        $region70: #{tpu_custom_call.1} parent=27 // pred_check_branch
          %601 = sbr.rel (%p599) target = $region72
        $region71: #{tpu_custom_call.1} parent=27 // pred_region
          %p602 = scmp.lt.s32.totalorder %s37, 1
          %s603 = scalar_select %p602, %s37, 1
          %s604 = smul.addr %s603, 8
          %s605 = smul.addr %s604, 8
          %s606 = scalar_lea.vmem %s11, %s605
        $region72: #{tpu_custom_call.1} parent=27 // pred_fallthru
          _
        // Predicated region
        $region73: #{tpu_custom_call.1} parent=27 // pred_check
          %p607 = pneg %p373
        $region74: #{tpu_custom_call.1} parent=27 // pred_check_branch
          %609 = sbr.rel (%p607) target = $region76
        $region75: #{tpu_custom_call.1} parent=27 // pred_region
          %p610 = scmp.lt.s32.totalorder %s37, 1
          %s611 = scalar_select %p610, %s37, 1
          %s612 = scalar_lea.vmem %s12, %s611
        $region76: #{tpu_custom_call.1} parent=27 // pred_fallthru
          _
      $region28: #{tpu_custom_call.1} parent=5 // pred_fallthru
        _
      %p613 = scmp.le.s32.totalorder 1, %s29
      %p614 = scmp.lt.s32.totalorder %s29, 3
      %p615 = pnand %p613, %p614
      %p616 = pneg %p615
      // Predicated region
      $region77: #{tpu_custom_call.1} parent=5 // pred_check
        _
      $region78: #{tpu_custom_call.1} parent=5 // pred_check_branch
        %618 = sbr.rel (%p615) target = $region80
      $region79: #{tpu_custom_call.1} parent=5 // pred_region
        %s619 = ssub.s32 %s29, 1
        // Predicated region
        $region81: #{tpu_custom_call.1} parent=79 // pred_check
          %p620 = pneg %p67
        $region82: #{tpu_custom_call.1} parent=79 // pred_check_branch
          %622 = sbr.rel (%p620) target = $region84
        $region83: #{tpu_custom_call.1} parent=79 // pred_region
          %624 = dma.done [#allocation4], 256
        $region84: #{tpu_custom_call.1} parent=79 // pred_fallthru
          _
        %s625 = sand.u32 %s34, 1
        %s626 = scalar_lea.sflag [#allocation7], %s625
        %s627 = sand.u32 %s106, 1
        %s628 = scalar_lea.vmem [#allocation6], %s627
        // Predicated region
        $region85: #{tpu_custom_call.1} parent=79 // pred_check
          %p629 = pneg %p119
        $region86: #{tpu_custom_call.1} parent=79 // pred_check_branch
          %631 = sbr.rel (%p629) target = $region88
        $region87: #{tpu_custom_call.1} parent=79 // pred_region
          %633 = dma.done %s626, 16
        $region88: #{tpu_custom_call.1} parent=79 // pred_fallthru
          _
        %s634 = sand.u32 %s34, 1
        %s635 = scalar_lea.sflag [#allocation7], %s634
        %s636 = sand.u32 %s184, 1
        %s637 = scalar_lea.vmem [#allocation8], %s636
        // Predicated region
        $region89: #{tpu_custom_call.1} parent=79 // pred_check
          %p638 = pneg %p197
        $region90: #{tpu_custom_call.1} parent=79 // pred_check_branch
          %640 = sbr.rel (%p638) target = $region92
        $region91: #{tpu_custom_call.1} parent=79 // pred_region
          %642 = dma.done %s635, 16
        $region92: #{tpu_custom_call.1} parent=79 // pred_fallthru
          _
        %s643 = sand.u32 %s34, 1
        %s644 = scalar_lea.sflag [#allocation10], %s643
        %s645 = sand.u32 %s236, 1
        %s646 = scalar_lea.vmem [#allocation9], %s645
        // Predicated region
        $region93: #{tpu_custom_call.1} parent=79 // pred_check
          %p647 = pneg %p249
        $region94: #{tpu_custom_call.1} parent=79 // pred_check_branch
          %649 = sbr.rel (%p647) target = $region96
        $region95: #{tpu_custom_call.1} parent=79 // pred_region
          %651 = dma.done %s644, 16
        $region96: #{tpu_custom_call.1} parent=79 // pred_fallthru
          _
        %s652 = sand.u32 %s34, 1
        %s653 = scalar_lea.sflag [#allocation10], %s652
        %s654 = sand.u32 %s262, 1
        %s655 = scalar_lea.vmem [#allocation11], %s654
        // Predicated region
        $region97: #{tpu_custom_call.1} parent=79 // pred_check
          %p656 = pneg %p275
        $region98: #{tpu_custom_call.1} parent=79 // pred_check_branch
          %658 = sbr.rel (%p656) target = $region100
        $region99: #{tpu_custom_call.1} parent=79 // pred_region
          %660 = dma.done %s653, 16
        $region100: #{tpu_custom_call.1} parent=79 // pred_fallthru
          _
        %p661 = pneg %p67
        %p662 = pneg %p64
        %p663 = scmp.lt.s32.totalorder %s39, 1
        %s664 = scalar_select %p663, %s39, 1
        %s665 = smul.addr %s664, 4
        %s666 = smul.addr %s665, 8
        %s667 = scalar_lea.vmem %s1, %s666
        %p668 = pneg %p93
        %p669 = pneg %p90
        %s670 = sand.u32 %s34, 1
        %s671 = scalar_lea.sflag [#allocation7], %s670
        %s672 = sand.u32 %s106, 1
        %s673 = scalar_lea.vmem [#allocation6], %s672
        %p674 = pneg %p119
        %p675 = pneg %p116
        %p676 = scmp.lt.s32.totalorder %s39, 1
        %s677 = scalar_select %p676, %s39, 1
        %s678 = smul.addr %s677, 4
        %s679 = smul.addr %s678, 8
        %s680 = scalar_lea.vmem %s3, %s679
        %p681 = pneg %p145
        %p682 = pneg %p142
        %p683 = scmp.lt.s32.totalorder %s39, 1
        %s684 = scalar_select %p683, %s39, 1
        %s685 = scalar_lea.vmem %s4, %s684
        %p686 = pneg %p171
        %p687 = pneg %p168
        %s688 = sand.u32 %s34, 1
        %s689 = scalar_lea.sflag [#allocation7], %s688
        %s690 = sand.u32 %s184, 1
        %s691 = scalar_lea.vmem [#allocation8], %s690
        %p692 = pneg %p197
        %p693 = pneg %p194
        %p694 = scmp.lt.s32.totalorder %s39, 1
        %s695 = scalar_select %p694, %s39, 1
        %s696 = scalar_lea.vmem %s6, %s695
        %p697 = pneg %p223
        %p698 = pneg %p220
        %s699 = sand.u32 %s34, 1
        %s700 = scalar_lea.sflag [#allocation10], %s699
        %s701 = sand.u32 %s236, 1
        %s702 = scalar_lea.vmem [#allocation9], %s701
        %p703 = pneg %p249
        %p704 = pneg %p246
        %s705 = sand.u32 %s34, 1
        %s706 = scalar_lea.sflag [#allocation10], %s705
        %s707 = sand.u32 %s262, 1
        %s708 = scalar_lea.vmem [#allocation11], %s707
        %p709 = pneg %p275
        %p710 = pneg %p272
        %p711 = scmp.lt.s32.totalorder %s39, 1
        %s712 = scalar_select %p711, %s39, 1
        %s713 = smul.addr %s712, 4
        %s714 = smul.addr %s713, 8
        %s715 = scalar_lea.vmem %s9, %s714
        %p716 = pneg %p301
        %p717 = pneg %p298
        %p718 = scmp.lt.s32.totalorder %s39, 1
        %s719 = scalar_select %p718, %s39, 1
        %s720 = scalar_lea.vmem %s10, %s719
        %p721 = pneg %p327
        %p722 = pneg %p324
        %p723 = scmp.lt.s32.totalorder %s39, 1
        %s724 = scalar_select %p723, %s39, 1
        %s725 = smul.addr %s724, 8
        %s726 = smul.addr %s725, 8
        %s727 = scalar_lea.vmem %s11, %s726
        %p728 = pneg %p353
        %p729 = pneg %p350
        %p730 = scmp.lt.s32.totalorder %s39, 1
        %s731 = scalar_select %p730, %s39, 1
        %s732 = scalar_lea.vmem %s12, %s731
        %p733 = pneg %p379
        %p734 = pneg %p376
        %p735 = pneg %p400
        %p736 = pneg %p397
        %p737 = pneg %p421
        %p738 = pneg %p418
        %p739 = pneg %p447
        %p740 = pneg %p444
        %s741 = smul.u32 2, %s38
        %p742 = scmp.lt.s32.totalorder %s39, 1
        %s743 = scalar_select %p742, %s39, 1
        %s744 = smul.addr %s743, 4
        %s745 = smul.addr %s744, 8
        %s746 = scalar_lea.vmem %s1, %s745
        %p747 = scmp.lt.s32.totalorder %s39, 1
        %s748 = scalar_select %p747, %s39, 1
        %s749 = smul.addr %s748, 4
        %s750 = smul.addr %s749, 8
        %s751 = scalar_lea.vmem %s3, %s750
        %p752 = scmp.lt.s32.totalorder %s39, 1
        %s753 = scalar_select %p752, %s39, 1
        %s754 = scalar_lea.vmem %s4, %s753
        %p755 = scmp.lt.s32.totalorder %s39, 1
        %s756 = scalar_select %p755, %s39, 1
        %s757 = scalar_lea.vmem %s6, %s756
        %p758 = scmp.lt.s32.totalorder %s39, 1
        %s759 = scalar_select %p758, %s39, 1
        %s760 = smul.addr %s759, 4
        %s761 = smul.addr %s760, 8
        %s762 = scalar_lea.vmem %s9, %s761
        %p763 = scmp.lt.s32.totalorder %s39, 1
        %s764 = scalar_select %p763, %s39, 1
        %s765 = scalar_lea.vmem %s10, %s764
        %p766 = scmp.lt.s32.totalorder %s39, 1
        %s767 = scalar_select %p766, %s39, 1
        %s768 = smul.addr %s767, 8
        %s769 = smul.addr %s768, 8
        %s770 = scalar_lea.vmem %s11, %s769
        %p771 = scmp.lt.s32.totalorder %s39, 1
        %s772 = scalar_select %p771, %s39, 1
        %s773 = scalar_lea.vmem %s12, %s772
        %s774 = smul.u32 2, %s38
        %p775 = scmp.eq.s32.totalorder %s39, 0
        // Predicated region
        $region101: #{tpu_custom_call.1} parent=79 // pred_check
          %p776 = pneg %p775
        $region102: #{tpu_custom_call.1} parent=79 // pred_check_branch
          %778 = sbr.rel (%p776) target = $region104
        $region103: #{tpu_custom_call.1} parent=79 // pred_region
          %v779 = vld [vmem:[#allocation3] sm:$0xff]
          %v780 = vld [vmem:[#allocation3 + $0x8] sm:$0xff]
          %vm781 = vcmask 261120
          %782 = vst.msk [vmem:[#allocation2] sm:$0xff] %vm781, %v779
          %783 = vst.msk [vmem:[#allocation2 + $0x8] sm:$0xff] %vm781, %v780
        $region104: #{tpu_custom_call.1} parent=79 // pred_fallthru
          _
        %v784 = vld [vmem:[#allocation2] sm:$0xff]
        %v785 = vld [vmem:[#allocation2 + $0x8] sm:$0xff]
        %v786 = vld [vmem:[%s637] sm:$0x1]
        %v787 = vld [vmem:[%s757] sm:$0x1]
        %vm788 = vcmask 261120
        %v789 = vsel %vm788, %v784, 0.0
        %790 = vadd.xlane.f32.xlu0 %v789
        %v791 = vpop.xlane.xlu0 %790
        %v792 = vsel %vm788, %v785, 0.0
        %793 = vadd.xlane.f32.xlu0 %v792
        %v794 = vpop.xlane.xlu0 %793
        %v795 = vrcp.pop 32.0
        %v796 = vmul.f32 32.0, %v795
        %v797 = vsub.f32 1.0, %v796
        %v798 = vmul.f32 %v795, %v797
        %v799 = vadd.f32 %v795, %v798
        %vm800 = vweird.f32 %v795
        %v801 = vsel %vm800, %v795, %v799
        %v802 = vmul.f32 %v791, %v801
        %v803 = vmul.f32 %v794, %v801
        %v804 = vsub.f32 %v784, %v802
        %v805 = vsub.f32 %v785, %v803
        %v806 = vmul.f32 %v804, %v804
        %v807 = vmul.f32 %v805, %v805
        %v808 = vsel %vm788, %v806, 0.0
        %809 = vadd.xlane.f32.xlu0 %v808
        %v810 = vpop.xlane.xlu0 %809
        %v811 = vsel %vm788, %v807, 0.0
        %812 = vadd.xlane.f32.xlu0 %v811
        %v813 = vpop.xlane.xlu0 %812
        %v814 = vmul.f32 %v810, %v801
        %v815 = vmul.f32 %v813, %v801
        %v816 = vadd.f32 %v814, 1e-06
        %v817 = vadd.f32 %v815, 1e-06
        %v818 = vrsqrt.pop %v816
        %v819 = vmul.f32 %v818, %v816
        %v820 = vmul.f32 %v819, %v818
        %v821 = vmul.f32 0.5, %v820
        %v822 = vsub.f32 1.5, %v821
        %v823 = vmul.f32 %v818, %v822
        %vm824 = vweird.f32 %v816
        %vm825 = vweird.f32 %v818
        %vm826 = vmor %vm824, %vm825
        %v827 = vsel %vm826, %v818, %v823
        %v828 = vrsqrt.pop %v817
        %v829 = vmul.f32 %v828, %v817
        %v830 = vmul.f32 %v829, %v828
        %v831 = vmul.f32 0.5, %v830
        %v832 = vsub.f32 1.5, %v831
        %v833 = vmul.f32 %v828, %v832
        %vm834 = vweird.f32 %v817
        %vm835 = vweird.f32 %v828
        %vm836 = vmor %vm834, %vm835
        %v837 = vsel %vm836, %v828, %v833
        %v838 = vmul.f32 %v804, %v827
        %v839 = vmul.f32 %v805, %v837
        %v841 = vperm.slane %v786, 0
        %v843 = vmul.f32 %v838, %v841
        %v844 = vmul.f32 %v839, %v841
        %v846 = vperm.slane %v787, 0
        %v848 = vadd.f32 %v843, %v846
        %v849 = vadd.f32 %v844, %v846
        %v850 = vld [vmem:[%s746] sm:$0xff]
        %v851 = vld [vmem:[%s746 + $0x8] sm:$0xff]
        %v852 = vld [vmem:[%s746 + $0x10] sm:$0xff]
        %v853 = vld [vmem:[%s746 + $0x18] sm:$0xff]
        %v854 = vld [vmem:[%s628] sm:$0x1]
        %v856 = vperm.slane %v854, 0
        %v859 = vsel %vm788, %v848, 0
        %v862 = vsel %vm788, %v849, 0
        %864 = vmatpush.msra.mxu0 0.0
        %865 = vmatpush.msra.mxu0 0.0
        %866 = vmatpush.msra.mxu0 0.0
        %867 = vmatpush.msra.mxu0 0.0
        %868 = vmatpush.msra.mxu0 0.0
        %869 = vmatpush.msra.mxu0 0.0
        %870 = vmatpush.msra.mxu0 0.0
        %871 = vmatpush.msra.mxu0 0.0
        %872 = vmatpush.msra.mxu0 0.0
        %873 = vmatpush.msra.mxu0 0.0
        %874 = vmatpush.msra.mxu0 0.0
        %875 = vmatpush.msra.mxu0 0.0
        %876 = vmatpush.msra.mxu0 %v853
        %877 = vmatpush.msra.mxu0 %v852
        %878 = vmatpush.msra.mxu0 %v851
        %879 = vmatpush.msra.mxu0 %v850
        %880 = vmatmul.f32.gmra.mxu0 %v859
        %v881 = vpop.f32.mrf.mxu0
        %v882 = vadd.f32 %v856, %v881
        %883 = vmatmul.f32.gmra.mxu0 %v862
        %v884 = vpop.f32.mrf.mxu0
        %v885 = vadd.f32 %v856, %v884
        %886 = vdwg.mxu0
        %v887 = vmul.f32 %v882, 0.35355338
        %v888 = vmul.f32 %v885, 0.35355338
        %890 = vrot.lane.b32.xlu0 %v882, 96
        %v891 = vpop.permute.xlu0 %890
        %vm892 = vcmask 64512
        %v894 = vsel %vm892, %v887, 0
        %v896 = vsel %vm892, %v891, 0
        %898 = vmatpush.xpose.msra.mxu0 0.0
        %899 = vmatpush.xpose.msra.mxu0 0.0
        %900 = vmatpush.xpose.msra.mxu0 0.0
        %901 = vmatpush.xpose.msra.mxu0 0.0
        %902 = vmatpush.xpose.msra.mxu0 0.0
        %903 = vmatpush.xpose.msra.mxu0 0.0
        %904 = vmatpush.xpose.msra.mxu0 0.0
        %905 = vmatpush.xpose.msra.mxu0 0.0
        %906 = vmatpush.xpose.msra.mxu0 0.0
        %907 = vmatpush.xpose.msra.mxu0 0.0
        %908 = vmatpush.xpose.msra.mxu0 0.0
        %909 = vmatpush.xpose.msra.mxu0 0.0
        %910 = vmatpush.xpose.msra.mxu0 0.0
        %911 = vmatpush.xpose.msra.mxu0 0.0
        %912 = vmatpush.xpose.msra.mxu0 0.0
        %913 = vmatpush.xpose.msra.mxu0 %v896
        %914 = vmatmul.f32.gmra.mxu0 %v894
        %v915 = vpop.f32.mrf.mxu0
        %v916 = vadd.f32 0.0, %v915
        %917 = vdwg.mxu0
        %919 = vrot.lane.b32.xlu0 %v885, 96
        %v920 = vpop.permute.xlu0 %919
        %v922 = vsel %vm892, %v888, 0
        %v924 = vsel %vm892, %v920, 0
        %926 = vmatpush.xpose.msra.mxu0 0.0
        %927 = vmatpush.xpose.msra.mxu0 0.0
        %928 = vmatpush.xpose.msra.mxu0 0.0
        %929 = vmatpush.xpose.msra.mxu0 0.0
        %930 = vmatpush.xpose.msra.mxu0 0.0
        %931 = vmatpush.xpose.msra.mxu0 0.0
        %932 = vmatpush.xpose.msra.mxu0 0.0
        %933 = vmatpush.xpose.msra.mxu0 0.0
        %934 = vmatpush.xpose.msra.mxu0 0.0
        %935 = vmatpush.xpose.msra.mxu0 0.0
        %936 = vmatpush.xpose.msra.mxu0 0.0
        %937 = vmatpush.xpose.msra.mxu0 0.0
        %938 = vmatpush.xpose.msra.mxu0 0.0
        %939 = vmatpush.xpose.msra.mxu0 0.0
        %940 = vmatpush.xpose.msra.mxu0 0.0
        %941 = vmatpush.xpose.msra.mxu0 %v924
        %942 = vmatmul.f32.gmra.mxu0 %v922
        %v943 = vpop.f32.mrf.mxu0
        %v944 = vadd.f32 0.0, %v943
        %945 = vdwg.mxu0
        %v946 = vsel %vm892, %v916, -inf
        %947 = vmax.xlane.f32.xlu0 %v946
        %v948 = vpop.xlane.xlu0 %947
        %v949 = vsel %vm892, %v944, -inf
        %950 = vmax.xlane.f32.xlu0 %v949
        %v951 = vpop.xlane.xlu0 %950
        %v952 = vsub.f32 %v916, %v948
        %v953 = vsub.f32 %v944, %v951
        %v954 = vmul.f32 %v952, 1.442695
        %v955 = vpow.pop %v954
        %v956 = vmul.f32 %v953, 1.442695
        %v957 = vpow.pop %v956
        %v958 = vsel %vm892, %v955, 0.0
        %959 = vadd.xlane.f32.xlu0 %v958
        %v960 = vpop.xlane.xlu0 %959
        %v961 = vsel %vm892, %v957, 0.0
        %962 = vadd.xlane.f32.xlu0 %v961
        %v963 = vpop.xlane.xlu0 %962
        %v964 = vrcp.pop %v960
        %v965 = vmul.f32 %v960, %v964
        %v966 = vsub.f32 1.0, %v965
        %v967 = vmul.f32 %v964, %v966
        %v968 = vadd.f32 %v964, %v967
        %vm969 = vweird.f32 %v960
        %vm970 = vweird.f32 %v964
        %vm971 = vmor %vm969, %vm970
        %v972 = vsel %vm971, %v964, %v968
        %v973 = vand.u32 2147483647, %v960
        %vm974 = vcmp.eq.f32.partialorder %v973, 8.507059e+37
        %v975 = vand.u32 %v960, 2147483648
        %v976 = vor.u32 1.1754944e-38, %v975
        %v977 = vsel %vm974, %v976, %v972
        %v978 = vmul.f32 %v955, %v977
        %v979 = vrcp.pop %v963
        %v980 = vmul.f32 %v963, %v979
        %v981 = vsub.f32 1.0, %v980
        %v982 = vmul.f32 %v979, %v981
        %v983 = vadd.f32 %v979, %v982
        %vm984 = vweird.f32 %v963
        %vm985 = vweird.f32 %v979
        %vm986 = vmor %vm984, %vm985
        %v987 = vsel %vm986, %v979, %v983
        %v988 = vand.u32 2147483647, %v963
        %vm989 = vcmp.eq.f32.partialorder %v988, 8.507059e+37
        %v990 = vand.u32 %v963, 2147483648
        %v991 = vor.u32 1.1754944e-38, %v990
        %v992 = vsel %vm989, %v991, %v987
        %v993 = vmul.f32 %v957, %v992
        %994 = vrot.lane.b32.xlu0 %v882, 64
        %v995 = vpop.permute.xlu0 %994
        %v998 = vsel %vm892, %v978, 0
        %1000 = vmatpush.msra.mxu0 0.0
        %1001 = vmatpush.msra.mxu0 0.0
        %1002 = vmatpush.msra.mxu0 0.0
        %1003 = vmatpush.msra.mxu0 0.0
        %1004 = vmatpush.msra.mxu0 0.0
        %1005 = vmatpush.msra.mxu0 0.0
        %1006 = vmatpush.msra.mxu0 0.0
        %1007 = vmatpush.msra.mxu0 0.0
        %1008 = vmatpush.msra.mxu0 0.0
        %1009 = vmatpush.msra.mxu0 0.0
        %1010 = vmatpush.msra.mxu0 0.0
        %1011 = vmatpush.msra.mxu0 0.0
        %1012 = vmatpush.msra.mxu0 0.0
        %1013 = vmatpush.msra.mxu0 0.0
        %1014 = vmatpush.msra.mxu0 0.0
        %1015 = vmatpush.msra.mxu0 %v995
        %1016 = vmatmul.f32.gmra.mxu0 %v998
        %v1017 = vpop.f32.mrf.mxu0
        %v1018 = vadd.f32 0.0, %v1017
        %1019 = vdwg.mxu0
        %1020 = vrot.lane.b32.xlu0 %v885, 64
        %v1021 = vpop.permute.xlu0 %1020
        %v1024 = vsel %vm892, %v993, 0
        %1026 = vmatpush.msra.mxu0 0.0
        %1027 = vmatpush.msra.mxu0 0.0
        %1028 = vmatpush.msra.mxu0 0.0
        %1029 = vmatpush.msra.mxu0 0.0
        %1030 = vmatpush.msra.mxu0 0.0
        %1031 = vmatpush.msra.mxu0 0.0
        %1032 = vmatpush.msra.mxu0 0.0
        %1033 = vmatpush.msra.mxu0 0.0
        %1034 = vmatpush.msra.mxu0 0.0
        %1035 = vmatpush.msra.mxu0 0.0
        %1036 = vmatpush.msra.mxu0 0.0
        %1037 = vmatpush.msra.mxu0 0.0
        %1038 = vmatpush.msra.mxu0 0.0
        %1039 = vmatpush.msra.mxu0 0.0
        %1040 = vmatpush.msra.mxu0 0.0
        %1041 = vmatpush.msra.mxu0 %v1021
        %1042 = vmatmul.f32.gmra.mxu0 %v1024
        %v1043 = vpop.f32.mrf.mxu0
        %v1044 = vadd.f32 0.0, %v1043
        %1045 = vdwg.mxu0
        %1046 = vrot.lane.b32.xlu0 %v887, 120
        %v1047 = vpop.permute.xlu0 %1046
        %1048 = vrot.lane.b32.xlu0 %v882, 88
        %v1049 = vpop.permute.xlu0 %1048
        %v1050 = vsel %vm892, %v1047, 0
        %v1052 = vsel %vm892, %v1049, 0
        %1054 = vmatpush.xpose.msra.mxu0 0.0
        %1055 = vmatpush.xpose.msra.mxu0 0.0
        %1056 = vmatpush.xpose.msra.mxu0 0.0
        %1057 = vmatpush.xpose.msra.mxu0 0.0
        %1058 = vmatpush.xpose.msra.mxu0 0.0
        %1059 = vmatpush.xpose.msra.mxu0 0.0
        %1060 = vmatpush.xpose.msra.mxu0 0.0
        %1061 = vmatpush.xpose.msra.mxu0 0.0
        %1062 = vmatpush.xpose.msra.mxu0 0.0
        %1063 = vmatpush.xpose.msra.mxu0 0.0
        %1064 = vmatpush.xpose.msra.mxu0 0.0
        %1065 = vmatpush.xpose.msra.mxu0 0.0
        %1066 = vmatpush.xpose.msra.mxu0 0.0
        %1067 = vmatpush.xpose.msra.mxu0 0.0
        %1068 = vmatpush.xpose.msra.mxu0 0.0
        %1069 = vmatpush.xpose.msra.mxu0 %v1052
        %1070 = vmatmul.f32.gmra.mxu0 %v1050
        %v1071 = vpop.f32.mrf.mxu0
        %v1072 = vadd.f32 0.0, %v1071
        %1073 = vdwg.mxu0
        %1074 = vrot.lane.b32.xlu0 %v888, 120
        %v1075 = vpop.permute.xlu0 %1074
        %1076 = vrot.lane.b32.xlu0 %v885, 88
        %v1077 = vpop.permute.xlu0 %1076
        %v1078 = vsel %vm892, %v1075, 0
        %v1080 = vsel %vm892, %v1077, 0
        %1082 = vmatpush.xpose.msra.mxu0 0.0
        %1083 = vmatpush.xpose.msra.mxu0 0.0
        %1084 = vmatpush.xpose.msra.mxu0 0.0
        %1085 = vmatpush.xpose.msra.mxu0 0.0
        %1086 = vmatpush.xpose.msra.mxu0 0.0
        %1087 = vmatpush.xpose.msra.mxu0 0.0
        %1088 = vmatpush.xpose.msra.mxu0 0.0
        %1089 = vmatpush.xpose.msra.mxu0 0.0
        %1090 = vmatpush.xpose.msra.mxu0 0.0
        %1091 = vmatpush.xpose.msra.mxu0 0.0
        %1092 = vmatpush.xpose.msra.mxu0 0.0
        %1093 = vmatpush.xpose.msra.mxu0 0.0
        %1094 = vmatpush.xpose.msra.mxu0 0.0
        %1095 = vmatpush.xpose.msra.mxu0 0.0
        %1096 = vmatpush.xpose.msra.mxu0 0.0
        %1097 = vmatpush.xpose.msra.mxu0 %v1080
        %1098 = vmatmul.f32.gmra.mxu0 %v1078
        %v1099 = vpop.f32.mrf.mxu0
        %v1100 = vadd.f32 0.0, %v1099
        %1101 = vdwg.mxu0
        %v1102 = vsel %vm892, %v1072, -inf
        %1103 = vmax.xlane.f32.xlu0 %v1102
        %v1104 = vpop.xlane.xlu0 %1103
        %v1105 = vsel %vm892, %v1100, -inf
        %1106 = vmax.xlane.f32.xlu0 %v1105
        %v1107 = vpop.xlane.xlu0 %1106
        %v1108 = vsub.f32 %v1072, %v1104
        %v1109 = vsub.f32 %v1100, %v1107
        %v1110 = vmul.f32 %v1108, 1.442695
        %v1111 = vpow.pop %v1110
        %v1112 = vmul.f32 %v1109, 1.442695
        %v1113 = vpow.pop %v1112
        %v1114 = vsel %vm892, %v1111, 0.0
        %1115 = vadd.xlane.f32.xlu0 %v1114
        %v1116 = vpop.xlane.xlu0 %1115
        %v1117 = vsel %vm892, %v1113, 0.0
        %1118 = vadd.xlane.f32.xlu0 %v1117
        %v1119 = vpop.xlane.xlu0 %1118
        %v1120 = vrcp.pop %v1116
        %v1121 = vmul.f32 %v1116, %v1120
        %v1122 = vsub.f32 1.0, %v1121
        %v1123 = vmul.f32 %v1120, %v1122
        %v1124 = vadd.f32 %v1120, %v1123
        %vm1125 = vweird.f32 %v1116
        %vm1126 = vweird.f32 %v1120
        %vm1127 = vmor %vm1125, %vm1126
        %v1128 = vsel %vm1127, %v1120, %v1124
        %v1129 = vand.u32 2147483647, %v1116
        %vm1130 = vcmp.eq.f32.partialorder %v1129, 8.507059e+37
        %v1131 = vand.u32 %v1116, 2147483648
        %v1132 = vor.u32 1.1754944e-38, %v1131
        %v1133 = vsel %vm1130, %v1132, %v1128
        %v1134 = vmul.f32 %v1111, %v1133
        %v1135 = vrcp.pop %v1119
        %v1136 = vmul.f32 %v1119, %v1135
        %v1137 = vsub.f32 1.0, %v1136
        %v1138 = vmul.f32 %v1135, %v1137
        %v1139 = vadd.f32 %v1135, %v1138
        %vm1140 = vweird.f32 %v1119
        %vm1141 = vweird.f32 %v1135
        %vm1142 = vmor %vm1140, %vm1141
        %v1143 = vsel %vm1142, %v1135, %v1139
        %v1144 = vand.u32 2147483647, %v1119
        %vm1145 = vcmp.eq.f32.partialorder %v1144, 8.507059e+37
        %v1146 = vand.u32 %v1119, 2147483648
        %v1147 = vor.u32 1.1754944e-38, %v1146
        %v1148 = vsel %vm1145, %v1147, %v1143
        %v1149 = vmul.f32 %v1113, %v1148
        %1150 = vrot.lane.b32.xlu0 %v882, 56
        %v1151 = vpop.permute.xlu0 %1150
        %v1154 = vsel %vm892, %v1134, 0
        %1156 = vmatpush.msra.mxu0 0.0
        %1157 = vmatpush.msra.mxu0 0.0
        %1158 = vmatpush.msra.mxu0 0.0
        %1159 = vmatpush.msra.mxu0 0.0
        %1160 = vmatpush.msra.mxu0 0.0
        %1161 = vmatpush.msra.mxu0 0.0
        %1162 = vmatpush.msra.mxu0 0.0
        %1163 = vmatpush.msra.mxu0 0.0
        %1164 = vmatpush.msra.mxu0 0.0
        %1165 = vmatpush.msra.mxu0 0.0
        %1166 = vmatpush.msra.mxu0 0.0
        %1167 = vmatpush.msra.mxu0 0.0
        %1168 = vmatpush.msra.mxu0 0.0
        %1169 = vmatpush.msra.mxu0 0.0
        %1170 = vmatpush.msra.mxu0 0.0
        %1171 = vmatpush.msra.mxu0 %v1151
        %1172 = vmatmul.f32.gmra.mxu0 %v1154
        %v1173 = vpop.f32.mrf.mxu0
        %v1174 = vadd.f32 0.0, %v1173
        %1175 = vdwg.mxu0
        %1176 = vrot.lane.b32.xlu0 %v885, 56
        %v1177 = vpop.permute.xlu0 %1176
        %v1180 = vsel %vm892, %v1149, 0
        %1182 = vmatpush.msra.mxu0 0.0
        %1183 = vmatpush.msra.mxu0 0.0
        %1184 = vmatpush.msra.mxu0 0.0
        %1185 = vmatpush.msra.mxu0 0.0
        %1186 = vmatpush.msra.mxu0 0.0
        %1187 = vmatpush.msra.mxu0 0.0
        %1188 = vmatpush.msra.mxu0 0.0
        %1189 = vmatpush.msra.mxu0 0.0
        %1190 = vmatpush.msra.mxu0 0.0
        %1191 = vmatpush.msra.mxu0 0.0
        %1192 = vmatpush.msra.mxu0 0.0
        %1193 = vmatpush.msra.mxu0 0.0
        %1194 = vmatpush.msra.mxu0 0.0
        %1195 = vmatpush.msra.mxu0 0.0
        %1196 = vmatpush.msra.mxu0 0.0
        %1197 = vmatpush.msra.mxu0 %v1177
        %1198 = vmatmul.f32.gmra.mxu0 %v1180
        %v1199 = vpop.f32.mrf.mxu0
        %v1200 = vadd.f32 0.0, %v1199
        %1201 = vdwg.mxu0
        %1202 = vrot.lane.b32.xlu0 %v887, 112
        %v1203 = vpop.permute.xlu0 %1202
        %1204 = vrot.lane.b32.xlu0 %v882, 80
        %v1205 = vpop.permute.xlu0 %1204
        %v1206 = vsel %vm892, %v1203, 0
        %v1208 = vsel %vm892, %v1205, 0
        %1210 = vmatpush.xpose.msra.mxu0 0.0
        %1211 = vmatpush.xpose.msra.mxu0 0.0
        %1212 = vmatpush.xpose.msra.mxu0 0.0
        %1213 = vmatpush.xpose.msra.mxu0 0.0
        %1214 = vmatpush.xpose.msra.mxu0 0.0
        %1215 = vmatpush.xpose.msra.mxu0 0.0
        %1216 = vmatpush.xpose.msra.mxu0 0.0
        %1217 = vmatpush.xpose.msra.mxu0 0.0
        %1218 = vmatpush.xpose.msra.mxu0 0.0
        %1219 = vmatpush.xpose.msra.mxu0 0.0
        %1220 = vmatpush.xpose.msra.mxu0 0.0
        %1221 = vmatpush.xpose.msra.mxu0 0.0
        %1222 = vmatpush.xpose.msra.mxu0 0.0
        %1223 = vmatpush.xpose.msra.mxu0 0.0
        %1224 = vmatpush.xpose.msra.mxu0 0.0
        %1225 = vmatpush.xpose.msra.mxu0 %v1208
        %1226 = vmatmul.f32.gmra.mxu0 %v1206
        %v1227 = vpop.f32.mrf.mxu0
        %v1228 = vadd.f32 0.0, %v1227
        %1229 = vdwg.mxu0
        %1230 = vrot.lane.b32.xlu0 %v888, 112
        %v1231 = vpop.permute.xlu0 %1230
        %1232 = vrot.lane.b32.xlu0 %v885, 80
        %v1233 = vpop.permute.xlu0 %1232
        %v1234 = vsel %vm892, %v1231, 0
        %v1236 = vsel %vm892, %v1233, 0
        %1238 = vmatpush.xpose.msra.mxu0 0.0
        %1239 = vmatpush.xpose.msra.mxu0 0.0
        %1240 = vmatpush.xpose.msra.mxu0 0.0
        %1241 = vmatpush.xpose.msra.mxu0 0.0
        %1242 = vmatpush.xpose.msra.mxu0 0.0
        %1243 = vmatpush.xpose.msra.mxu0 0.0
        %1244 = vmatpush.xpose.msra.mxu0 0.0
        %1245 = vmatpush.xpose.msra.mxu0 0.0
        %1246 = vmatpush.xpose.msra.mxu0 0.0
        %1247 = vmatpush.xpose.msra.mxu0 0.0
        %1248 = vmatpush.xpose.msra.mxu0 0.0
        %1249 = vmatpush.xpose.msra.mxu0 0.0
        %1250 = vmatpush.xpose.msra.mxu0 0.0
        %1251 = vmatpush.xpose.msra.mxu0 0.0
        %1252 = vmatpush.xpose.msra.mxu0 0.0
        %1253 = vmatpush.xpose.msra.mxu0 %v1236
        %1254 = vmatmul.f32.gmra.mxu0 %v1234
        %v1255 = vpop.f32.mrf.mxu0
        %v1256 = vadd.f32 0.0, %v1255
        %1257 = vdwg.mxu0
        %v1258 = vsel %vm892, %v1228, -inf
        %1259 = vmax.xlane.f32.xlu0 %v1258
        %v1260 = vpop.xlane.xlu0 %1259
        %v1261 = vsel %vm892, %v1256, -inf
        %1262 = vmax.xlane.f32.xlu0 %v1261
        %v1263 = vpop.xlane.xlu0 %1262
        %v1264 = vsub.f32 %v1228, %v1260
        %v1265 = vsub.f32 %v1256, %v1263
        %v1266 = vmul.f32 %v1264, 1.442695
        %v1267 = vpow.pop %v1266
        %v1268 = vmul.f32 %v1265, 1.442695
        %v1269 = vpow.pop %v1268
        %v1270 = vsel %vm892, %v1267, 0.0
        %1271 = vadd.xlane.f32.xlu0 %v1270
        %v1272 = vpop.xlane.xlu0 %1271
        %v1273 = vsel %vm892, %v1269, 0.0
        %1274 = vadd.xlane.f32.xlu0 %v1273
        %v1275 = vpop.xlane.xlu0 %1274
        %v1276 = vrcp.pop %v1272
        %v1277 = vmul.f32 %v1272, %v1276
        %v1278 = vsub.f32 1.0, %v1277
        %v1279 = vmul.f32 %v1276, %v1278
        %v1280 = vadd.f32 %v1276, %v1279
        %vm1281 = vweird.f32 %v1272
        %vm1282 = vweird.f32 %v1276
        %vm1283 = vmor %vm1281, %vm1282
        %v1284 = vsel %vm1283, %v1276, %v1280
        %v1285 = vand.u32 2147483647, %v1272
        %vm1286 = vcmp.eq.f32.partialorder %v1285, 8.507059e+37
        %v1287 = vand.u32 %v1272, 2147483648
        %v1288 = vor.u32 1.1754944e-38, %v1287
        %v1289 = vsel %vm1286, %v1288, %v1284
        %v1290 = vmul.f32 %v1267, %v1289
        %v1291 = vrcp.pop %v1275
        %v1292 = vmul.f32 %v1275, %v1291
        %v1293 = vsub.f32 1.0, %v1292
        %v1294 = vmul.f32 %v1291, %v1293
        %v1295 = vadd.f32 %v1291, %v1294
        %vm1296 = vweird.f32 %v1275
        %vm1297 = vweird.f32 %v1291
        %vm1298 = vmor %vm1296, %vm1297
        %v1299 = vsel %vm1298, %v1291, %v1295
        %v1300 = vand.u32 2147483647, %v1275
        %vm1301 = vcmp.eq.f32.partialorder %v1300, 8.507059e+37
        %v1302 = vand.u32 %v1275, 2147483648
        %v1303 = vor.u32 1.1754944e-38, %v1302
        %v1304 = vsel %vm1301, %v1303, %v1299
        %v1305 = vmul.f32 %v1269, %v1304
        %1306 = vrot.lane.b32.xlu0 %v882, 48
        %v1307 = vpop.permute.xlu0 %1306
        %v1310 = vsel %vm892, %v1290, 0
        %1312 = vmatpush.msra.mxu0 0.0
        %1313 = vmatpush.msra.mxu0 0.0
        %1314 = vmatpush.msra.mxu0 0.0
        %1315 = vmatpush.msra.mxu0 0.0
        %1316 = vmatpush.msra.mxu0 0.0
        %1317 = vmatpush.msra.mxu0 0.0
        %1318 = vmatpush.msra.mxu0 0.0
        %1319 = vmatpush.msra.mxu0 0.0
        %1320 = vmatpush.msra.mxu0 0.0
        %1321 = vmatpush.msra.mxu0 0.0
        %1322 = vmatpush.msra.mxu0 0.0
        %1323 = vmatpush.msra.mxu0 0.0
        %1324 = vmatpush.msra.mxu0 0.0
        %1325 = vmatpush.msra.mxu0 0.0
        %1326 = vmatpush.msra.mxu0 0.0
        %1327 = vmatpush.msra.mxu0 %v1307
        %1328 = vmatmul.f32.gmra.mxu0 %v1310
        %v1329 = vpop.f32.mrf.mxu0
        %v1330 = vadd.f32 0.0, %v1329
        %1331 = vdwg.mxu0
        %1332 = vrot.lane.b32.xlu0 %v885, 48
        %v1333 = vpop.permute.xlu0 %1332
        %v1336 = vsel %vm892, %v1305, 0
        %1338 = vmatpush.msra.mxu0 0.0
        %1339 = vmatpush.msra.mxu0 0.0
        %1340 = vmatpush.msra.mxu0 0.0
        %1341 = vmatpush.msra.mxu0 0.0
        %1342 = vmatpush.msra.mxu0 0.0
        %1343 = vmatpush.msra.mxu0 0.0
        %1344 = vmatpush.msra.mxu0 0.0
        %1345 = vmatpush.msra.mxu0 0.0
        %1346 = vmatpush.msra.mxu0 0.0
        %1347 = vmatpush.msra.mxu0 0.0
        %1348 = vmatpush.msra.mxu0 0.0
        %1349 = vmatpush.msra.mxu0 0.0
        %1350 = vmatpush.msra.mxu0 0.0
        %1351 = vmatpush.msra.mxu0 0.0
        %1352 = vmatpush.msra.mxu0 0.0
        %1353 = vmatpush.msra.mxu0 %v1333
        %1354 = vmatmul.f32.gmra.mxu0 %v1336
        %v1355 = vpop.f32.mrf.mxu0
        %v1356 = vadd.f32 0.0, %v1355
        %1357 = vdwg.mxu0
        %1358 = vrot.lane.b32.xlu0 %v887, 104
        %v1359 = vpop.permute.xlu0 %1358
        %1360 = vrot.lane.b32.xlu0 %v882, 72
        %v1361 = vpop.permute.xlu0 %1360
        %v1362 = vsel %vm892, %v1359, 0
        %v1364 = vsel %vm892, %v1361, 0
        %1366 = vmatpush.xpose.msra.mxu0 0.0
        %1367 = vmatpush.xpose.msra.mxu0 0.0
        %1368 = vmatpush.xpose.msra.mxu0 0.0
        %1369 = vmatpush.xpose.msra.mxu0 0.0
        %1370 = vmatpush.xpose.msra.mxu0 0.0
        %1371 = vmatpush.xpose.msra.mxu0 0.0
        %1372 = vmatpush.xpose.msra.mxu0 0.0
        %1373 = vmatpush.xpose.msra.mxu0 0.0
        %1374 = vmatpush.xpose.msra.mxu0 0.0
        %1375 = vmatpush.xpose.msra.mxu0 0.0
        %1376 = vmatpush.xpose.msra.mxu0 0.0
        %1377 = vmatpush.xpose.msra.mxu0 0.0
        %1378 = vmatpush.xpose.msra.mxu0 0.0
        %1379 = vmatpush.xpose.msra.mxu0 0.0
        %1380 = vmatpush.xpose.msra.mxu0 0.0
        %1381 = vmatpush.xpose.msra.mxu0 %v1364
        %1382 = vmatmul.f32.gmra.mxu0 %v1362
        %v1383 = vpop.f32.mrf.mxu0
        %v1384 = vadd.f32 0.0, %v1383
        %1385 = vdwg.mxu0
        %1386 = vrot.lane.b32.xlu0 %v888, 104
        %v1387 = vpop.permute.xlu0 %1386
        %1388 = vrot.lane.b32.xlu0 %v885, 72
        %v1389 = vpop.permute.xlu0 %1388
        %v1390 = vsel %vm892, %v1387, 0
        %v1392 = vsel %vm892, %v1389, 0
        %1394 = vmatpush.xpose.msra.mxu0 0.0
        %1395 = vmatpush.xpose.msra.mxu0 0.0
        %1396 = vmatpush.xpose.msra.mxu0 0.0
        %1397 = vmatpush.xpose.msra.mxu0 0.0
        %1398 = vmatpush.xpose.msra.mxu0 0.0
        %1399 = vmatpush.xpose.msra.mxu0 0.0
        %1400 = vmatpush.xpose.msra.mxu0 0.0
        %1401 = vmatpush.xpose.msra.mxu0 0.0
        %1402 = vmatpush.xpose.msra.mxu0 0.0
        %1403 = vmatpush.xpose.msra.mxu0 0.0
        %1404 = vmatpush.xpose.msra.mxu0 0.0
        %1405 = vmatpush.xpose.msra.mxu0 0.0
        %1406 = vmatpush.xpose.msra.mxu0 0.0
        %1407 = vmatpush.xpose.msra.mxu0 0.0
        %1408 = vmatpush.xpose.msra.mxu0 0.0
        %1409 = vmatpush.xpose.msra.mxu0 %v1392
        %1410 = vmatmul.f32.gmra.mxu0 %v1390
        %v1411 = vpop.f32.mrf.mxu0
        %v1412 = vadd.f32 0.0, %v1411
        %1413 = vdwg.mxu0
        %v1414 = vsel %vm892, %v1384, -inf
        %1415 = vmax.xlane.f32.xlu0 %v1414
        %v1416 = vpop.xlane.xlu0 %1415
        %v1417 = vsel %vm892, %v1412, -inf
        %1418 = vmax.xlane.f32.xlu0 %v1417
        %v1419 = vpop.xlane.xlu0 %1418
        %v1420 = vsub.f32 %v1384, %v1416
        %v1421 = vsub.f32 %v1412, %v1419
        %v1422 = vmul.f32 %v1420, 1.442695
        %v1423 = vpow.pop %v1422
        %v1424 = vmul.f32 %v1421, 1.442695
        %v1425 = vpow.pop %v1424
        %v1426 = vsel %vm892, %v1423, 0.0
        %1427 = vadd.xlane.f32.xlu0 %v1426
        %v1428 = vpop.xlane.xlu0 %1427
        %v1429 = vsel %vm892, %v1425, 0.0
        %1430 = vadd.xlane.f32.xlu0 %v1429
        %v1431 = vpop.xlane.xlu0 %1430
        %v1432 = vrcp.pop %v1428
        %v1433 = vmul.f32 %v1428, %v1432
        %v1434 = vsub.f32 1.0, %v1433
        %v1435 = vmul.f32 %v1432, %v1434
        %v1436 = vadd.f32 %v1432, %v1435
        %vm1437 = vweird.f32 %v1428
        %vm1438 = vweird.f32 %v1432
        %vm1439 = vmor %vm1437, %vm1438
        %v1440 = vsel %vm1439, %v1432, %v1436
        %v1441 = vand.u32 2147483647, %v1428
        %vm1442 = vcmp.eq.f32.partialorder %v1441, 8.507059e+37
        %v1443 = vand.u32 %v1428, 2147483648
        %v1444 = vor.u32 1.1754944e-38, %v1443
        %v1445 = vsel %vm1442, %v1444, %v1440
        %v1446 = vmul.f32 %v1423, %v1445
        %v1447 = vrcp.pop %v1431
        %v1448 = vmul.f32 %v1431, %v1447
        %v1449 = vsub.f32 1.0, %v1448
        %v1450 = vmul.f32 %v1447, %v1449
        %v1451 = vadd.f32 %v1447, %v1450
        %vm1452 = vweird.f32 %v1431
        %vm1453 = vweird.f32 %v1447
        %vm1454 = vmor %vm1452, %vm1453
        %v1455 = vsel %vm1454, %v1447, %v1451
        %v1456 = vand.u32 2147483647, %v1431
        %vm1457 = vcmp.eq.f32.partialorder %v1456, 8.507059e+37
        %v1458 = vand.u32 %v1431, 2147483648
        %v1459 = vor.u32 1.1754944e-38, %v1458
        %v1460 = vsel %vm1457, %v1459, %v1455
        %v1461 = vmul.f32 %v1425, %v1460
        %1462 = vrot.lane.b32.xlu0 %v882, 40
        %v1463 = vpop.permute.xlu0 %1462
        %v1466 = vsel %vm892, %v1446, 0
        %1468 = vmatpush.msra.mxu0 0.0
        %1469 = vmatpush.msra.mxu0 0.0
        %1470 = vmatpush.msra.mxu0 0.0
        %1471 = vmatpush.msra.mxu0 0.0
        %1472 = vmatpush.msra.mxu0 0.0
        %1473 = vmatpush.msra.mxu0 0.0
        %1474 = vmatpush.msra.mxu0 0.0
        %1475 = vmatpush.msra.mxu0 0.0
        %1476 = vmatpush.msra.mxu0 0.0
        %1477 = vmatpush.msra.mxu0 0.0
        %1478 = vmatpush.msra.mxu0 0.0
        %1479 = vmatpush.msra.mxu0 0.0
        %1480 = vmatpush.msra.mxu0 0.0
        %1481 = vmatpush.msra.mxu0 0.0
        %1482 = vmatpush.msra.mxu0 0.0
        %1483 = vmatpush.msra.mxu0 %v1463
        %1484 = vmatmul.f32.gmra.mxu0 %v1466
        %v1485 = vpop.f32.mrf.mxu0
        %v1486 = vadd.f32 0.0, %v1485
        %1487 = vdwg.mxu0
        %1488 = vrot.lane.b32.xlu0 %v885, 40
        %v1489 = vpop.permute.xlu0 %1488
        %v1492 = vsel %vm892, %v1461, 0
        %1494 = vmatpush.msra.mxu0 0.0
        %1495 = vmatpush.msra.mxu0 0.0
        %1496 = vmatpush.msra.mxu0 0.0
        %1497 = vmatpush.msra.mxu0 0.0
        %1498 = vmatpush.msra.mxu0 0.0
        %1499 = vmatpush.msra.mxu0 0.0
        %1500 = vmatpush.msra.mxu0 0.0
        %1501 = vmatpush.msra.mxu0 0.0
        %1502 = vmatpush.msra.mxu0 0.0
        %1503 = vmatpush.msra.mxu0 0.0
        %1504 = vmatpush.msra.mxu0 0.0
        %1505 = vmatpush.msra.mxu0 0.0
        %1506 = vmatpush.msra.mxu0 0.0
        %1507 = vmatpush.msra.mxu0 0.0
        %1508 = vmatpush.msra.mxu0 0.0
        %1509 = vmatpush.msra.mxu0 %v1489
        %1510 = vmatmul.f32.gmra.mxu0 %v1492
        %v1511 = vpop.f32.mrf.mxu0
        %v1512 = vadd.f32 0.0, %v1511
        %1513 = vdwg.mxu0
        %1516 = vrot.lane.b32.xlu0 %v1174, 8
        %v1517 = vpop.permute.xlu0 %1516
        %1518 = vrot.lane.b32.xlu0 %v1200, 8
        %v1519 = vpop.permute.xlu0 %1518
        %1524 = vrot.lane.b32.xlu0 %v1330, 16
        %v1525 = vpop.permute.xlu0 %1524
        %1526 = vrot.lane.b32.xlu0 %v1356, 16
        %v1527 = vpop.permute.xlu0 %1526
        %1532 = vrot.lane.b32.xlu0 %v1486, 24
        %v1533 = vpop.permute.xlu0 %1532
        %1534 = vrot.lane.b32.xlu0 %v1512, 24
        %v1535 = vpop.permute.xlu0 %1534
        %v1538 = vsel %vm892, %v1018, %v1517
        %v1539 = vsel %vm892, %v1044, %v1519
        %vm1540 = vcmask 130048
        %v1541 = vsel %vm1540, %v1538, %v1525
        %v1542 = vsel %vm1540, %v1539, %v1527
        %vm1543 = vcmask 195584
        %v1544 = vsel %vm1543, %v1541, %v1533
        %v1545 = vsel %vm1543, %v1542, %v1535
        %v1546 = vld [vmem:[%s751] sm:$0xff]
        %v1547 = vld [vmem:[%s751 + $0x8] sm:$0xff]
        %v1548 = vld [vmem:[%s751 + $0x10] sm:$0xff]
        %v1549 = vld [vmem:[%s751 + $0x18] sm:$0xff]
        %v1550 = vld [vmem:[%s754] sm:$0x1]
        %v1552 = vperm.slane %v1550, 0
        %v1555 = vsel %vm788, %v1544, 0
        %v1558 = vsel %vm788, %v1545, 0
        %1560 = vmatpush.msra.mxu0 0.0
        %1561 = vmatpush.msra.mxu0 0.0
        %1562 = vmatpush.msra.mxu0 0.0
        %1563 = vmatpush.msra.mxu0 0.0
        %1564 = vmatpush.msra.mxu0 0.0
        %1565 = vmatpush.msra.mxu0 0.0
        %1566 = vmatpush.msra.mxu0 0.0
        %1567 = vmatpush.msra.mxu0 0.0
        %1568 = vmatpush.msra.mxu0 0.0
        %1569 = vmatpush.msra.mxu0 0.0
        %1570 = vmatpush.msra.mxu0 0.0
        %1571 = vmatpush.msra.mxu0 0.0
        %1572 = vmatpush.msra.mxu0 %v1549
        %1573 = vmatpush.msra.mxu0 %v1548
        %1574 = vmatpush.msra.mxu0 %v1547
        %1575 = vmatpush.msra.mxu0 %v1546
        %1576 = vmatmul.f32.gmra.mxu0 %v1555
        %v1577 = vpop.f32.mrf.mxu0
        %v1578 = vadd.f32 %v1552, %v1577
        %1579 = vmatmul.f32.gmra.mxu0 %v1558
        %v1580 = vpop.f32.mrf.mxu0
        %v1581 = vadd.f32 %v1552, %v1580
        %1582 = vdwg.mxu0
        %v1583 = vadd.f32 %v784, %v1578
        %v1584 = vadd.f32 %v785, %v1581
        %v1585 = vld [vmem:[%s646] sm:$0x1]
        %v1586 = vld [vmem:[%s655] sm:$0x1]
        %v1587 = vsel %vm788, %v1583, 0.0
        %1588 = vadd.xlane.f32.xlu0 %v1587
        %v1589 = vpop.xlane.xlu0 %1588
        %v1590 = vsel %vm788, %v1584, 0.0
        %1591 = vadd.xlane.f32.xlu0 %v1590
        %v1592 = vpop.xlane.xlu0 %1591
        %v1593 = vmul.f32 %v1589, %v801
        %v1594 = vmul.f32 %v1592, %v801
        %v1595 = vsub.f32 %v1583, %v1593
        %v1596 = vsub.f32 %v1584, %v1594
        %v1597 = vmul.f32 %v1595, %v1595
        %v1598 = vmul.f32 %v1596, %v1596
        %v1599 = vsel %vm788, %v1597, 0.0
        %1600 = vadd.xlane.f32.xlu0 %v1599
        %v1601 = vpop.xlane.xlu0 %1600
        %v1602 = vsel %vm788, %v1598, 0.0
        %1603 = vadd.xlane.f32.xlu0 %v1602
        %v1604 = vpop.xlane.xlu0 %1603
        %v1605 = vmul.f32 %v1601, %v801
        %v1606 = vmul.f32 %v1604, %v801
        %v1607 = vadd.f32 %v1605, 1e-06
        %v1608 = vadd.f32 %v1606, 1e-06
        %v1609 = vrsqrt.pop %v1607
        %v1610 = vmul.f32 %v1609, %v1607
        %v1611 = vmul.f32 %v1610, %v1609
        %v1612 = vmul.f32 0.5, %v1611
        %v1613 = vsub.f32 1.5, %v1612
        %v1614 = vmul.f32 %v1609, %v1613
        %vm1615 = vweird.f32 %v1607
        %vm1616 = vweird.f32 %v1609
        %vm1617 = vmor %vm1615, %vm1616
        %v1618 = vsel %vm1617, %v1609, %v1614
        %v1619 = vrsqrt.pop %v1608
        %v1620 = vmul.f32 %v1619, %v1608
        %v1621 = vmul.f32 %v1620, %v1619
        %v1622 = vmul.f32 0.5, %v1621
        %v1623 = vsub.f32 1.5, %v1622
        %v1624 = vmul.f32 %v1619, %v1623
        %vm1625 = vweird.f32 %v1608
        %vm1626 = vweird.f32 %v1619
        %vm1627 = vmor %vm1625, %vm1626
        %v1628 = vsel %vm1627, %v1619, %v1624
        %v1629 = vmul.f32 %v1595, %v1618
        %v1630 = vmul.f32 %v1596, %v1628
        %v1632 = vperm.slane %v1585, 0
        %v1634 = vmul.f32 %v1629, %v1632
        %v1635 = vmul.f32 %v1630, %v1632
        %v1637 = vperm.slane %v1586, 0
        %v1639 = vadd.f32 %v1634, %v1637
        %v1640 = vadd.f32 %v1635, %v1637
        %v1641 = vld [vmem:[%s762] sm:$0xff]
        %v1642 = vld [vmem:[%s762 + $0x8] sm:$0xff]
        %v1643 = vld [vmem:[%s762 + $0x10] sm:$0xff]
        %v1644 = vld [vmem:[%s762 + $0x18] sm:$0xff]
        %v1645 = vld [vmem:[%s765] sm:$0x1]
        %v1647 = vperm.slane %v1645, 0
        %v1650 = vsel %vm788, %v1639, 0
        %v1653 = vsel %vm788, %v1640, 0
        %1655 = vmatpush.msra.mxu0 0.0
        %1656 = vmatpush.msra.mxu0 0.0
        %1657 = vmatpush.msra.mxu0 0.0
        %1658 = vmatpush.msra.mxu0 0.0
        %1659 = vmatpush.msra.mxu0 0.0
        %1660 = vmatpush.msra.mxu0 0.0
        %1661 = vmatpush.msra.mxu0 0.0
        %1662 = vmatpush.msra.mxu0 0.0
        %1663 = vmatpush.msra.mxu0 0.0
        %1664 = vmatpush.msra.mxu0 0.0
        %1665 = vmatpush.msra.mxu0 0.0
        %1666 = vmatpush.msra.mxu0 0.0
        %1667 = vmatpush.msra.mxu0 %v1644
        %1668 = vmatpush.msra.mxu0 %v1643
        %1669 = vmatpush.msra.mxu0 %v1642
        %1670 = vmatpush.msra.mxu0 %v1641
        %1671 = vmatmul.f32.gmra.mxu0 %v1650
        %v1672 = vpop.f32.mrf.mxu0
        %v1673 = vadd.f32 %v1647, %v1672
        %1674 = vmatmul.f32.gmra.mxu0 %v1653
        %v1675 = vpop.f32.mrf.mxu0
        %v1676 = vadd.f32 %v1647, %v1675
        %1677 = vdwg.mxu0
        %v1678 = vmax.f32 %v1673, 0.0
        %v1679 = vmax.f32 %v1676, 0.0
        %v1680 = vld [vmem:[%s770] sm:$0xff]
        %v1681 = vld [vmem:[%s770 + $0x8] sm:$0xff]
        %v1682 = vld [vmem:[%s770 + $0x10] sm:$0xff]
        %v1683 = vld [vmem:[%s770 + $0x18] sm:$0xff]
        %v1684 = vld [vmem:[%s770 + $0x20] sm:$0xff]
        %v1685 = vld [vmem:[%s770 + $0x28] sm:$0xff]
        %v1686 = vld [vmem:[%s770 + $0x30] sm:$0xff]
        %v1687 = vld [vmem:[%s770 + $0x38] sm:$0xff]
        %vm1688 = vcmask 523264
        %v1690 = vsel %vm1688, %v1678, 0
        %v1693 = vsel %vm1688, %v1679, 0
        %1695 = vmatpush.msra.mxu0 0.0
        %1696 = vmatpush.msra.mxu0 0.0
        %1697 = vmatpush.msra.mxu0 0.0
        %1698 = vmatpush.msra.mxu0 0.0
        %1699 = vmatpush.msra.mxu0 0.0
        %1700 = vmatpush.msra.mxu0 0.0
        %1701 = vmatpush.msra.mxu0 0.0
        %1702 = vmatpush.msra.mxu0 0.0
        %1703 = vmatpush.msra.mxu0 %v1687
        %1704 = vmatpush.msra.mxu0 %v1686
        %1705 = vmatpush.msra.mxu0 %v1685
        %1706 = vmatpush.msra.mxu0 %v1684
        %1707 = vmatpush.msra.mxu0 %v1683
        %1708 = vmatpush.msra.mxu0 %v1682
        %1709 = vmatpush.msra.mxu0 %v1681
        %1710 = vmatpush.msra.mxu0 %v1680
        %1711 = vmatmul.f32.gmra.mxu0 %v1690
        %v1712 = vpop.f32.mrf.mxu0
        %v1713 = vadd.f32 0.0, %v1712
        %1714 = vmatmul.f32.gmra.mxu0 %v1693
        %v1715 = vpop.f32.mrf.mxu0
        %v1716 = vadd.f32 0.0, %v1715
        %1717 = vdwg.mxu0
        %v1718 = vadd.f32 %v1583, %v1713
        %v1719 = vadd.f32 %v1584, %v1716
        %v1720 = vld [vmem:[%s773] sm:$0x1]
        %v1722 = vperm.slane %v1720, 0
        %v1724 = vadd.f32 %v1718, %v1722
        %v1725 = vadd.f32 %v1719, %v1722
        %1726 = vst.msk [vmem:[#allocation2] sm:$0xff] %vm788, %v1724
        %1727 = vst.msk [vmem:[#allocation2 + $0x8] sm:$0xff] %vm788, %v1725
        %p1728 = scmp.eq.s32.totalorder %s39, 1
        // Predicated region
        $region105: #{tpu_custom_call.1} parent=79 // pred_check
          %p1729 = pneg %p1728
        $region106: #{tpu_custom_call.1} parent=79 // pred_check_branch
          %1731 = sbr.rel (%p1729) target = $region108
        $region107: #{tpu_custom_call.1} parent=79 // pred_region
          %v1732 = vld [vmem:[#allocation2] sm:$0xff]
          %v1733 = vld [vmem:[#allocation2 + $0x8] sm:$0xff]
          %v1734 = vld [vmem:[%s13] sm:$0x1]
          %v1735 = vld [vmem:[%s14] sm:$0x1]
          %v1736 = vsel %vm788, %v1732, 0.0
          %1737 = vadd.xlane.f32.xlu0 %v1736
          %v1738 = vpop.xlane.xlu0 %1737
          %v1739 = vsel %vm788, %v1733, 0.0
          %1740 = vadd.xlane.f32.xlu0 %v1739
          %v1741 = vpop.xlane.xlu0 %1740
          %v1742 = vmul.f32 %v1738, %v801
          %v1743 = vmul.f32 %v1741, %v801
          %v1744 = vsub.f32 %v1732, %v1742
          %v1745 = vsub.f32 %v1733, %v1743
          %v1746 = vmul.f32 %v1744, %v1744
          %v1747 = vmul.f32 %v1745, %v1745
          %v1748 = vsel %vm788, %v1746, 0.0
          %1749 = vadd.xlane.f32.xlu0 %v1748
          %v1750 = vpop.xlane.xlu0 %1749
          %v1751 = vsel %vm788, %v1747, 0.0
          %1752 = vadd.xlane.f32.xlu0 %v1751
          %v1753 = vpop.xlane.xlu0 %1752
          %v1754 = vmul.f32 %v1750, %v801
          %v1755 = vmul.f32 %v1753, %v801
          %v1756 = vadd.f32 %v1754, 1e-06
          %v1757 = vadd.f32 %v1755, 1e-06
          %v1758 = vrsqrt.pop %v1756
          %v1759 = vmul.f32 %v1758, %v1756
          %v1760 = vmul.f32 %v1759, %v1758
          %v1761 = vmul.f32 0.5, %v1760
          %v1762 = vsub.f32 1.5, %v1761
          %v1763 = vmul.f32 %v1758, %v1762
          %vm1764 = vweird.f32 %v1756
          %vm1765 = vweird.f32 %v1758
          %vm1766 = vmor %vm1764, %vm1765
          %v1767 = vsel %vm1766, %v1758, %v1763
          %v1768 = vrsqrt.pop %v1757
          %v1769 = vmul.f32 %v1768, %v1757
          %v1770 = vmul.f32 %v1769, %v1768
          %v1771 = vmul.f32 0.5, %v1770
          %v1772 = vsub.f32 1.5, %v1771
          %v1773 = vmul.f32 %v1768, %v1772
          %vm1774 = vweird.f32 %v1757
          %vm1775 = vweird.f32 %v1768
          %vm1776 = vmor %vm1774, %vm1775
          %v1777 = vsel %vm1776, %v1768, %v1773
          %v1778 = vmul.f32 %v1744, %v1767
          %v1779 = vmul.f32 %v1745, %v1777
          %v1781 = vperm.slane %v1734, 0
          %v1783 = vmul.f32 %v1778, %v1781
          %v1784 = vmul.f32 %v1779, %v1781
          %v1786 = vperm.slane %v1735, 0
          %v1788 = vadd.f32 %v1783, %v1786
          %v1789 = vadd.f32 %v1784, %v1786
          %1790 = vst.msk [vmem:[#allocation12] sm:$0xff] %vm788, %v1788
          %1791 = vst.msk [vmem:[#allocation12 + $0x8] sm:$0xff] %vm788, %v1789
        $region108: #{tpu_custom_call.1} parent=79 // pred_fallthru
          _
        // Predicated region
        $region109: #{tpu_custom_call.1} parent=79 // pred_check
          %p1792 = pneg %p444
        $region110: #{tpu_custom_call.1} parent=79 // pred_check_branch
          %1794 = sbr.rel (%p1792) target = $region112
        $region111: #{tpu_custom_call.1} parent=79 // pred_region
          %s1795 = smul.u32 2, %s38
          %1797 = vsyncadd [#allocation5], 0
          %s1798 = smul.addr %s1795, 8
          %s1799 = scalar_lea.hbm %s15, %s1798
          %s1800 = sshll.u32 [#allocation12], 4
          %s1801 = int_to_ptr.vmem [resolvable:$true] %s1800
          %s1802 = sshll.u32 %s1799, 4
          %s1803 = int_to_ptr.hbm [resolvable:$true] %s1802
          %1808 = dma.vmem_to_hbm [thread:$0]  %s1801, 256, %s1803, [#allocation5], 128, 128, 8
        $region112: #{tpu_custom_call.1} parent=79 // pred_fallthru
          _
        // Predicated region
        $region113: #{tpu_custom_call.1} parent=79 // pred_check
          %p1809 = pneg %p444
        $region114: #{tpu_custom_call.1} parent=79 // pred_check_branch
          %1811 = sbr.rel (%p1809) target = $region116
        $region115: #{tpu_custom_call.1} parent=79 // pred_region
          %1813 = dma.done [#allocation5], 256
        $region116: #{tpu_custom_call.1} parent=79 // pred_fallthru
          _
      $region80: #{tpu_custom_call.1} parent=5 // pred_fallthru
        _
      %p1814 = scmp.le.s32.totalorder 2, %s29
      // Predicated region
      $region117: #{tpu_custom_call.1} parent=5 // pred_check
        %p1815 = pneg %p1814
      $region118: #{tpu_custom_call.1} parent=5 // pred_check_branch
        %1817 = sbr.rel (%p1815) target = $region120
      $region119: #{tpu_custom_call.1} parent=5 // pred_region
        %s1818 = ssub.s32 %s29, 2
      $region120: #{tpu_custom_call.1} parent=5 // pred_fallthru
        _
    $region6: #{tpu_custom_call.1} parent=1 // loop_footer
      %s33 = sadd.s32 1, %s29
    $region7: #{tpu_custom_call.1} parent=1 // loop_footer_branch
      %28 = sbr.rel target = $region3
    $region8: #{tpu_custom_call.1} parent=1 // loop_exit
      _
    %1819 = vsyncpa [#allocation4], 1
    %s1820 = scalar_lea.sflag [#allocation4], 1
    %1821 = vsyncpa %s1820, 1
    %1822 = vsyncpa [#allocation7], 1
    %s1823 = scalar_lea.sflag [#allocation7], 1
    %1824 = vsyncpa %s1823, 1
    %1825 = vsyncpa [#allocation10], 1
    %s1826 = scalar_lea.sflag [#allocation10], 1
    %1827 = vsyncpa %s1826, 1
    %1828 = vsyncpa [#allocation5], 1
    %s1829 = scalar_lea.sflag [#allocation5], 1
    %1830 = vsyncpa %s1829, 1

</llo_original>
